<compile_context>
chip_gen: v7x
topology: tpu7x:2x2x1
jax: 0.10.0
libtpu: 0.0.40
codegen_flags: <defaults>
</compile_context>

<pallas_src>
import math

import jax
import jax.numpy as jnp
from jax.experimental import pallas as pl
from jax.experimental.pallas import tpu as pltpu

N_NODES = 16      # number of graph nodes (attention sequence length L)
IN_DIM = 8        # input_dim
HID_DIM = 32      # hidden_dim (embed_dim of MultiheadAttention)
OUT_DIM = 4       # output_dim
NUM_HEADS = 4
HEAD_DIM = HID_DIM // NUM_HEADS

LANE = 128        # packed lane width / lane-dense output width

# Row offsets of each weight inside the packed weight array (all multiples of 8).
R_W1F = 0                     # (IN_DIM, 3*HID_DIM)   conv1 folded into in_proj
R_W2F = R_W1F + IN_DIM        # (HID_DIM, 3*HID_DIM)  conv2 folded into in_proj
R_WO = R_W2F + HID_DIM        # (HID_DIM, HID_DIM)    attention out_proj
R_W3 = R_WO + HID_DIM         # (HID_DIM, LANE)       conv3, zero-padded lane-dense
W_ROWS = R_W3 + HID_DIM       # 104

# Row offsets inside the packed bias/constant array (16, 128).
R_B1F, R_B2F, R_BO, R_B3 = 0, 1, 2, 3
R_MASK = 8                    # (NUM_HEADS, HID_DIM) head-selection mask


def complex_gcn_kernel(adj_ref, x_ref, w_ref, b_ref, o_ref):
    adj = adj_ref[...]

    # --- unpack weights / biases with static, aligned slices (free views) ---
    w1f = w_ref[R_W1F:R_W1F + IN_DIM, 0:3 * HID_DIM]     # (8, 96)
    w2f = w_ref[R_W2F:R_W2F + HID_DIM, 0:3 * HID_DIM]    # (32, 96)
    wo = w_ref[R_WO:R_WO + HID_DIM, 0:HID_DIM]           # (32, 32)
    w3 = w_ref[R_W3:R_W3 + HID_DIM, :]                   # (32, 128), cols >=4 zero

    b1f = b_ref[R_B1F:R_B1F + 1, 0:3 * HID_DIM]          # (1, 96)
    b2f = b_ref[R_B2F:R_B2F + 1, 0:3 * HID_DIM]          # (1, 96)
    bo = b_ref[R_BO:R_BO + 1, 0:HID_DIM]                 # (1, 32)
    b3 = b_ref[R_B3:R_B3 + 1, :]                         # (1, 128), cols >=4 zero
    # head-selection mask baked host-side: mask[h, f] = 1.0 iff feature f
    # belongs to head h (no in-kernel iota / int math).
    head_mask = b_ref[R_MASK:R_MASK + NUM_HEADS, 0:HID_DIM]   # (4, 32)
    mask3 = head_mask[:, None, :]                              # (4, 1, 32)

    def mha(qkv):
        # qkv already contains the fused (conv_i -> in_proj) projection with
        # the 1/sqrt(head_dim) scale folded into the q columns host-side.
        q = qkv[:, 0:HID_DIM]
        k = qkv[:, HID_DIM:2 * HID_DIM]
        v = qkv[:, 2 * HID_DIM:3 * HID_DIM]
        k_t = k.T                                   # single XLU transpose (32, 16)
        # head-batched attention: zero non-head lanes of q (scores) and v
        # (context) so the full-width contraction equals the per-head one and
        # the sum over heads reconstructs the concat -- no per-head slicing.
        q_m = jnp.broadcast_to(q, (NUM_HEADS, N_NODES, HID_DIM)) * mask3
        v_m = jnp.broadcast_to(v, (NUM_HEADS, N_NODES, HID_DIM)) * mask3
        k_b = jnp.broadcast_to(k_t, (NUM_HEADS, HID_DIM, N_NODES))
        s = jnp.einsum('hqf,hfk->hqk', q_m, k_b,
                       preferred_element_type=jnp.float32)     # (H, N, N)
        m = jnp.max(s, axis=-1, keepdims=True)                 # kept: safe softmax
        p = jnp.exp(s - m)
        p = p / jnp.sum(p, axis=-1, keepdims=True)             # exact normalization
        ctx = jnp.einsum('hqk,hkf->hqf', p, v_m,
                         preferred_element_type=jnp.float32)   # (H, N, E)
        ctx = jnp.sum(ctx, axis=0)     # masked sum over heads == concat of heads
        return jnp.dot(ctx, wo, preferred_element_type=jnp.float32) + bo

    # layer 1: qkv = (A_hat @ x) @ (W1 @ W_in) + (b1 @ W_in + b_in)
    ax = jnp.dot(adj, x_ref[...], preferred_element_type=jnp.float32)   # (16, 8)
    qkv1 = jnp.dot(ax, w1f, preferred_element_type=jnp.float32) + b1f
    h = jnp.maximum(mha(qkv1), 0.0)               # attention (shared) + relu
    # TODO(synk): nn.Dropout is identity in eval mode; training-mode dropout omitted.

    # layer 2: qkv = (A_hat @ h) @ (W2 @ W_in) + (b2 @ W_in + b_in)
    ah = jnp.dot(adj, h, preferred_element_type=jnp.float32)            # (16, 32)
    qkv2 = jnp.dot(ah, w2f, preferred_element_type=jnp.float32) + b2f
    h = jnp.maximum(mha(qkv2), 0.0)               # attention (shared) + relu

    # conv3, reassociated: A_hat @ (h @ W3pad) + b3pad  -> lane-dense (16, 128)
    y = jnp.dot(adj, jnp.dot(h, w3, preferred_element_type=jnp.float32),
                preferred_element_type=jnp.float32) + b3
    o_ref[...] = jax.nn.sigmoid(y)                # sigmoid (cols >=4 hold 0.5)


def pack_params(params):
    """Host-side packing: fuse q/k/v, fold scale + W1/W2, pack to 2 arrays."""
    scale = 1.0 / math.sqrt(HEAD_DIM)
    w_in = jnp.concatenate(
        [params["wq"] * scale, params["wk"], params["wv"]], axis=1)   # (32, 96)
    b_in = jnp.concatenate(
        [params["bq"] * scale, params["bk"], params["bv"]], axis=1)   # (1, 96)

    # Fold conv1 / conv2 into the fused in_proj (their outputs are consumed
    # only by the attention q/k/v projection).
    w1f = params["w1"] @ w_in                        # (8, 96)
    b1f = params["b1"] @ w_in + b_in                 # (1, 96)
    w2f = params["w2"] @ w_in                        # (32, 96)
    b2f = params["b2"] @ w_in + b_in                 # (1, 96)

    W = jnp.zeros((W_ROWS, LANE), jnp.float32)
    W = W.at[R_W1F:R_W1F + IN_DIM, 0:3 * HID_DIM].set(w1f)
    W = W.at[R_W2F:R_W2F + HID_DIM, 0:3 * HID_DIM].set(w2f)
    W = W.at[R_WO:R_WO + HID_DIM, 0:HID_DIM].set(params["wo"])
    W = W.at[R_W3:R_W3 + HID_DIM, 0:OUT_DIM].set(params["w3"])

    B = jnp.zeros((16, LANE), jnp.float32)
    B = B.at[R_B1F, 0:3 * HID_DIM].set(b1f[0])
    B = B.at[R_B2F, 0:3 * HID_DIM].set(b2f[0])
    B = B.at[R_BO, 0:HID_DIM].set(params["bo"][0])
    B = B.at[R_B3, 0:OUT_DIM].set(params["b3"][0])
    head_mask = (jnp.arange(HID_DIM)[None, :] // HEAD_DIM
                 == jnp.arange(NUM_HEADS)[:, None]).astype(jnp.float32)  # (4, 32)
    B = B.at[R_MASK:R_MASK + NUM_HEADS, 0:HID_DIM].set(head_mask)
    return W, B


def complex_gcn_forward(adj_norm, x, params):
    W, B = pack_params(params)
    vmem = pl.BlockSpec(memory_space=pltpu.MemorySpace.VMEM)
    # Single graph, tiny shapes -> gridless single-TC call (working set <100 KiB).
    # To batch graphs: stack along a leading axis, grid=(B//G,), constant
    # index_maps for W/B (resident weights), and
    # compiler_params=pltpu.CompilerParams(dimension_semantics=("parallel",))
    # so v7x's second TensorCore is used.
    out_padded = pl.pallas_call(
        complex_gcn_kernel,
        out_shape=jax.ShapeDtypeStruct((N_NODES, LANE), jnp.float32),
        in_specs=[vmem, vmem, vmem, vmem],
        out_specs=vmem,
    )(adj_norm, x, W, B)
    # NOTE: padded columns 4..127 contain sigmoid(0)=0.5; never consume the
    # padded buffer directly.
    return out_padded[:, :OUT_DIM]


def build_norm_adj(edge_index, edge_weight, num_nodes):
    """Dense PyG-style gcn_norm: A_hat = D^{-1/2}(A_w + I)D^{-1/2}."""
    src, dst = edge_index[0], edge_index[1]
    adj = jnp.zeros((num_nodes, num_nodes), jnp.float32)
    adj = adj.at[dst, src].add(edge_weight.astype(jnp.float32))
    adj = adj + jnp.eye(num_nodes, dtype=jnp.float32)       # self loops, weight 1
    deg = jnp.sum(adj, axis=1)
    dinv = jax.lax.rsqrt(deg)
    return dinv[:, None] * adj * dinv[None, :]


def reference_forward(adj, x, params):
    """Plain-JAX reference (unfused, per-head attention, exact softmax)."""
    def gcn(h, w, b):
        return jnp.dot(jnp.dot(adj, h), w) + b

    def mha(h):
        q = h @ params["wq"] + params["bq"]
        k = h @ params["wk"] + params["bk"]
        v = h @ params["wv"] + params["bv"]
        scale = 1.0 / math.sqrt(HEAD_DIM)
        outs = []
        for hh in range(NUM_HEADS):
            sl = slice(hh * HEAD_DIM, (hh + 1) * HEAD_DIM)
            s = (q[:, sl] @ k[:, sl].T) * scale
            p = jax.nn.softmax(s, axis=-1)
            outs.append(p @ v[:, sl])
        ctx = jnp.concatenate(outs, axis=-1)
        return ctx @ params["wo"] + params["bo"]

    h = gcn(x, params["w1"], params["b1"])
    h = jnp.maximum(mha(h), 0.0)
    h = gcn(h, params["w2"], params["b2"])
    h = jnp.maximum(mha(h), 0.0)
    h = gcn(h, params["w3"], params["b3"])
    return jax.nn.sigmoid(h)


if __name__ == "__main__":
    key = jax.random.PRNGKey(0)
    keys = jax.random.split(key, 20)

    # deterministic inputs: node features + bidirectional ring graph with weights
    node_features = jax.random.normal(keys[0], (N_NODES, IN_DIM), jnp.float32)
    src = jnp.arange(N_NODES, dtype=jnp.int32)
    dst = (src + 1) % N_NODES
    edge_index = jnp.stack([jnp.concatenate([src, dst]),
                            jnp.concatenate([dst, src])])          # (2, 2N)
    ew = jax.random.uniform(keys[1], (N_NODES,), jnp.float32, 0.5, 1.5)
    edge_weight = jnp.concatenate([ew, ew])                        # (2N,)

    adj_norm = build_norm_adj(edge_index, edge_weight, N_NODES)

    def init(k, shape, scale=0.1):
        return scale * jax.random.normal(k, shape, jnp.float32)

    # deterministic synthetic parameters (shapes follow the torch module)
    params = {
        "w1": init(keys[2], (IN_DIM, HID_DIM)),    # GCNConv(input_dim, hidden_dim)
        "b1": init(keys[10], (1, HID_DIM), 0.05),
        "wq": init(keys[3], (HID_DIM, HID_DIM)),   # MHA in_proj q slice (transposed)
        "bq": init(keys[11], (1, HID_DIM), 0.05),
        "wk": init(keys[4], (HID_DIM, HID_DIM)),   # MHA in_proj k slice (transposed)
        "bk": init(keys[12], (1, HID_DIM), 0.05),
        "wv": init(keys[5], (HID_DIM, HID_DIM)),   # MHA in_proj v slice (transposed)
        "bv": init(keys[13], (1, HID_DIM), 0.05),
        "wo": init(keys[6], (HID_DIM, HID_DIM)),   # MHA out_proj (transposed)
        "bo": init(keys[14], (1, HID_DIM), 0.05),
        "w2": init(keys[7], (HID_DIM, HID_DIM)),   # GCNConv(hidden_dim, hidden_dim)
        "b2": init(keys[15], (1, HID_DIM), 0.05),
        "w3": init(keys[8], (HID_DIM, OUT_DIM)),   # GCNConv(hidden_dim, output_dim)
        "b3": init(keys[16], (1, OUT_DIM), 0.05),
    }

    out = complex_gcn_forward(adj_norm, node_features, params)
    out = jax.block_until_ready(out)
    assert out.shape == (N_NODES, OUT_DIM), out.shape
    assert bool(jnp.all(jnp.isfinite(out)))
    assert bool(jnp.all((out >= 0.0) & (out <= 1.0)))   # sigmoid range

    ref = reference_forward(adj_norm, node_features, params)
    max_err = float(jnp.max(jnp.abs(out - ref)))
    assert max_err < 2e-3, max_err

    print("KERNEL_OK")
</pallas_src>

<mosaic_0001>
module attributes {stable_mosaic.version = 11 : i64} {
  func.func @complex_gcn_kernel(%arg0: memref<16x16xf32, #tpu.memory_space<vmem>>, %arg1: memref<16x8xf32, #tpu.memory_space<vmem>>, %arg2: memref<104x128xf32, #tpu.memory_space<vmem>>, %arg3: memref<16x128xf32, #tpu.memory_space<vmem>>, %arg4: memref<16x128xf32, #tpu.memory_space<vmem>>) attributes {dimension_semantics = [], scalar_prefetch = 0 : i64, scratch_operands = 0 : i64, tpu.core_type = #tpu.core_type<tc>} {
    %c0 = arith.constant 0 : index
    %c0_0 = arith.constant 0 : index
    %0 = vector.load %arg0[%c0, %c0_0] : memref<16x16xf32, #tpu.memory_space<vmem>>, vector<16x16xf32>
    %c0_1 = arith.constant 0 : index
    %c0_2 = arith.constant 0 : index
    %1 = vector.load %arg2[%c0_1, %c0_2] : memref<104x128xf32, #tpu.memory_space<vmem>>, vector<8x96xf32>
    %c8 = arith.constant 8 : index
    %c0_3 = arith.constant 0 : index
    %2 = vector.load %arg2[%c8, %c0_3] : memref<104x128xf32, #tpu.memory_space<vmem>>, vector<32x96xf32>
    %c40 = arith.constant 40 : index
    %c0_4 = arith.constant 0 : index
    %3 = vector.load %arg2[%c40, %c0_4] : memref<104x128xf32, #tpu.memory_space<vmem>>, vector<32x32xf32>
    %c72 = arith.constant 72 : index
    %c0_5 = arith.constant 0 : index
    %4 = vector.load %arg2[%c72, %c0_5] : memref<104x128xf32, #tpu.memory_space<vmem>>, vector<32x128xf32>
    %c0_6 = arith.constant 0 : index
    %c0_7 = arith.constant 0 : index
    %5 = vector.load %arg3[%c0_6, %c0_7] : memref<16x128xf32, #tpu.memory_space<vmem>>, vector<1x96xf32>
    %c1 = arith.constant 1 : index
    %c0_8 = arith.constant 0 : index
    %6 = vector.load %arg3[%c1, %c0_8] : memref<16x128xf32, #tpu.memory_space<vmem>>, vector<1x96xf32>
    %c2 = arith.constant 2 : index
    %c0_9 = arith.constant 0 : index
    %7 = vector.load %arg3[%c2, %c0_9] : memref<16x128xf32, #tpu.memory_space<vmem>>, vector<1x32xf32>
    %c3 = arith.constant 3 : index
    %c0_10 = arith.constant 0 : index
    %8 = vector.load %arg3[%c3, %c0_10] : memref<16x128xf32, #tpu.memory_space<vmem>>, vector<1x128xf32>
    %c8_11 = arith.constant 8 : index
    %c0_12 = arith.constant 0 : index
    %9 = vector.load %arg3[%c8_11, %c0_12] : memref<16x128xf32, #tpu.memory_space<vmem>>, vector<4x32xf32>
    %10 = vector.shape_cast %9 : vector<4x32xf32> to vector<4x1x32xf32>
    %c0_13 = arith.constant 0 : index
    %c0_14 = arith.constant 0 : index
    %11 = vector.load %arg1[%c0_13, %c0_14] : memref<16x8xf32, #tpu.memory_space<vmem>>, vector<16x8xf32>
    %cst = arith.constant dense<0.000000e+00> : vector<16x8xf32>
    %12 = tpu.matmul %0, %11, %cst {dimension_numbers = #tpu.dot_dimension_numbers<[1], [0], [0], [1], [0, 0, 1, 1], [], []>} : vector<16x16xf32>, vector<16x8xf32>, vector<16x8xf32> -> vector<16x8xf32>
    %cst_15 = arith.constant dense<0.000000e+00> : vector<16x96xf32>
    %13 = tpu.matmul %12, %1, %cst_15 {dimension_numbers = #tpu.dot_dimension_numbers<[1], [0], [0], [1], [0, 0, 1, 1], [], []>} : vector<16x8xf32>, vector<8x96xf32>, vector<16x96xf32> -> vector<16x96xf32>
    %14 = vector.broadcast %5 : vector<1x96xf32> to vector<16x96xf32>
    %15 = arith.addf %13, %14 : vector<16x96xf32>
    %16 = vector.extract_strided_slice %15 {offsets = [0, 0], sizes = [16, 32], strides = [1, 1]} : vector<16x96xf32> to vector<16x32xf32>
    %17 = vector.extract_strided_slice %15 {offsets = [0, 32], sizes = [16, 32], strides = [1, 1]} : vector<16x96xf32> to vector<16x32xf32>
    %18 = vector.extract_strided_slice %15 {offsets = [0, 64], sizes = [16, 32], strides = [1, 1]} : vector<16x96xf32> to vector<16x32xf32>
    %19 = tpu.transpose %17, [1, 0] : vector<16x32xf32> -> vector<32x16xf32>
    %20 = vector.shape_cast %16 : vector<16x32xf32> to vector<1x16x32xf32>
    %21 = vector.broadcast %20 : vector<1x16x32xf32> to vector<4x16x32xf32>
    %22 = vector.broadcast %10 : vector<4x1x32xf32> to vector<4x16x32xf32>
    %23 = arith.mulf %21, %22 : vector<4x16x32xf32>
    %24 = vector.shape_cast %18 : vector<16x32xf32> to vector<1x16x32xf32>
    %25 = vector.broadcast %24 : vector<1x16x32xf32> to vector<4x16x32xf32>
    %26 = vector.broadcast %10 : vector<4x1x32xf32> to vector<4x16x32xf32>
    %27 = arith.mulf %25, %26 : vector<4x16x32xf32>
    %28 = vector.shape_cast %19 : vector<32x16xf32> to vector<1x32x16xf32>
    %29 = vector.broadcast %28 : vector<1x32x16xf32> to vector<4x32x16xf32>
    "tpu.trace_start"() <{level = 10 : i32, message = "hqf,hfk->hqk"}> : () -> ()
    %cst_16 = arith.constant dense<0.000000e+00> : vector<4x16x16xf32>
    %30 = tpu.matmul %23, %29, %cst_16 {dimension_numbers = #tpu.dot_dimension_numbers<[2], [1], [1], [2], [0, 0, 0, 1, 1, 2], [0], [0]>} : vector<4x16x32xf32>, vector<4x32x16xf32>, vector<4x16x16xf32> -> vector<4x16x16xf32>
    "tpu.trace_stop"() : () -> ()
    %cst_17 = arith.constant dense<0xFF800000> : vector<4x16xf32>
    %31 = vector.multi_reduction <maximumf>, %30, %cst_17 [2] : vector<4x16x16xf32> to vector<4x16xf32>
    %32 = vector.shape_cast %31 : vector<4x16xf32> to vector<4x16x1xf32>
    %33 = vector.broadcast %32 : vector<4x16x1xf32> to vector<4x16x16xf32>
    %34 = arith.subf %30, %33 : vector<4x16x16xf32>
    %35 = math.exp %34 : vector<4x16x16xf32>
    %cst_18 = arith.constant dense<0.000000e+00> : vector<4x16xf32>
    %36 = vector.multi_reduction <add>, %35, %cst_18 [2] : vector<4x16x16xf32> to vector<4x16xf32>
    %37 = vector.shape_cast %36 : vector<4x16xf32> to vector<4x16x1xf32>
    %38 = vector.broadcast %37 : vector<4x16x1xf32> to vector<4x16x16xf32>
    %39 = arith.divf %35, %38 : vector<4x16x16xf32>
    "tpu.trace_start"() <{level = 10 : i32, message = "hqk,hkf->hqf"}> : () -> ()
    %cst_19 = arith.constant dense<0.000000e+00> : vector<4x16x32xf32>
    %40 = tpu.matmul %39, %27, %cst_19 {dimension_numbers = #tpu.dot_dimension_numbers<[2], [1], [1], [2], [0, 0, 0, 1, 1, 2], [0], [0]>} : vector<4x16x16xf32>, vector<4x16x32xf32>, vector<4x16x32xf32> -> vector<4x16x32xf32>
    "tpu.trace_stop"() : () -> ()
    %cst_20 = arith.constant dense<0.000000e+00> : vector<16x32xf32>
    %41 = vector.multi_reduction <add>, %40, %cst_20 [0] : vector<4x16x32xf32> to vector<16x32xf32>
    %cst_21 = arith.constant dense<0.000000e+00> : vector<16x32xf32>
    %42 = tpu.matmul %41, %3, %cst_21 {dimension_numbers = #tpu.dot_dimension_numbers<[1], [0], [0], [1], [0, 0, 1, 1], [], []>} : vector<16x32xf32>, vector<32x32xf32>, vector<16x32xf32> -> vector<16x32xf32>
    %43 = vector.broadcast %7 : vector<1x32xf32> to vector<16x32xf32>
    %44 = arith.addf %42, %43 : vector<16x32xf32>
    %cst_22 = arith.constant 0.000000e+00 : f32
    %45 = vector.broadcast %cst_22 : f32 to vector<16x32xf32>
    %46 = arith.maximumf %44, %45 : vector<16x32xf32>
    %cst_23 = arith.constant dense<0.000000e+00> : vector<16x32xf32>
    %47 = tpu.matmul %0, %46, %cst_23 {dimension_numbers = #tpu.dot_dimension_numbers<[1], [0], [0], [1], [0, 0, 1, 1], [], []>} : vector<16x16xf32>, vector<16x32xf32>, vector<16x32xf32> -> vector<16x32xf32>
    %cst_24 = arith.constant dense<0.000000e+00> : vector<16x96xf32>
    %48 = tpu.matmul %47, %2, %cst_24 {dimension_numbers = #tpu.dot_dimension_numbers<[1], [0], [0], [1], [0, 0, 1, 1], [], []>} : vector<16x32xf32>, vector<32x96xf32>, vector<16x96xf32> -> vector<16x96xf32>
    %49 = vector.broadcast %6 : vector<1x96xf32> to vector<16x96xf32>
    %50 = arith.addf %48, %49 : vector<16x96xf32>
    %51 = vector.extract_strided_slice %50 {offsets = [0, 0], sizes = [16, 32], strides = [1, 1]} : vector<16x96xf32> to vector<16x32xf32>
    %52 = vector.extract_strided_slice %50 {offsets = [0, 32], sizes = [16, 32], strides = [1, 1]} : vector<16x96xf32> to vector<16x32xf32>
    %53 = vector.extract_strided_slice %50 {offsets = [0, 64], sizes = [16, 32], strides = [1, 1]} : vector<16x96xf32> to vector<16x32xf32>
    %54 = tpu.transpose %52, [1, 0] : vector<16x32xf32> -> vector<32x16xf32>
    %55 = vector.shape_cast %51 : vector<16x32xf32> to vector<1x16x32xf32>
    %56 = vector.broadcast %55 : vector<1x16x32xf32> to vector<4x16x32xf32>
    %57 = vector.broadcast %10 : vector<4x1x32xf32> to vector<4x16x32xf32>
    %58 = arith.mulf %56, %57 : vector<4x16x32xf32>
    %59 = vector.shape_cast %53 : vector<16x32xf32> to vector<1x16x32xf32>
    %60 = vector.broadcast %59 : vector<1x16x32xf32> to vector<4x16x32xf32>
    %61 = vector.broadcast %10 : vector<4x1x32xf32> to vector<4x16x32xf32>
    %62 = arith.mulf %60, %61 : vector<4x16x32xf32>
    %63 = vector.shape_cast %54 : vector<32x16xf32> to vector<1x32x16xf32>
    %64 = vector.broadcast %63 : vector<1x32x16xf32> to vector<4x32x16xf32>
    "tpu.trace_start"() <{level = 10 : i32, message = "hqf,hfk->hqk"}> : () -> ()
    %cst_25 = arith.constant dense<0.000000e+00> : vector<4x16x16xf32>
    %65 = tpu.matmul %58, %64, %cst_25 {dimension_numbers = #tpu.dot_dimension_numbers<[2], [1], [1], [2], [0, 0, 0, 1, 1, 2], [0], [0]>} : vector<4x16x32xf32>, vector<4x32x16xf32>, vector<4x16x16xf32> -> vector<4x16x16xf32>
    "tpu.trace_stop"() : () -> ()
    %cst_26 = arith.constant dense<0xFF800000> : vector<4x16xf32>
    %66 = vector.multi_reduction <maximumf>, %65, %cst_26 [2] : vector<4x16x16xf32> to vector<4x16xf32>
    %67 = vector.shape_cast %66 : vector<4x16xf32> to vector<4x16x1xf32>
    %68 = vector.broadcast %67 : vector<4x16x1xf32> to vector<4x16x16xf32>
    %69 = arith.subf %65, %68 : vector<4x16x16xf32>
    %70 = math.exp %69 : vector<4x16x16xf32>
    %cst_27 = arith.constant dense<0.000000e+00> : vector<4x16xf32>
    %71 = vector.multi_reduction <add>, %70, %cst_27 [2] : vector<4x16x16xf32> to vector<4x16xf32>
    %72 = vector.shape_cast %71 : vector<4x16xf32> to vector<4x16x1xf32>
    %73 = vector.broadcast %72 : vector<4x16x1xf32> to vector<4x16x16xf32>
    %74 = arith.divf %70, %73 : vector<4x16x16xf32>
    "tpu.trace_start"() <{level = 10 : i32, message = "hqk,hkf->hqf"}> : () -> ()
    %cst_28 = arith.constant dense<0.000000e+00> : vector<4x16x32xf32>
    %75 = tpu.matmul %74, %62, %cst_28 {dimension_numbers = #tpu.dot_dimension_numbers<[2], [1], [1], [2], [0, 0, 0, 1, 1, 2], [0], [0]>} : vector<4x16x16xf32>, vector<4x16x32xf32>, vector<4x16x32xf32> -> vector<4x16x32xf32>
    "tpu.trace_stop"() : () -> ()
    %cst_29 = arith.constant dense<0.000000e+00> : vector<16x32xf32>
    %76 = vector.multi_reduction <add>, %75, %cst_29 [0] : vector<4x16x32xf32> to vector<16x32xf32>
    %cst_30 = arith.constant dense<0.000000e+00> : vector<16x32xf32>
    %77 = tpu.matmul %76, %3, %cst_30 {dimension_numbers = #tpu.dot_dimension_numbers<[1], [0], [0], [1], [0, 0, 1, 1], [], []>} : vector<16x32xf32>, vector<32x32xf32>, vector<16x32xf32> -> vector<16x32xf32>
    %78 = vector.broadcast %7 : vector<1x32xf32> to vector<16x32xf32>
    %79 = arith.addf %77, %78 : vector<16x32xf32>
    %cst_31 = arith.constant 0.000000e+00 : f32
    %80 = vector.broadcast %cst_31 : f32 to vector<16x32xf32>
    %81 = arith.maximumf %79, %80 : vector<16x32xf32>
    %cst_32 = arith.constant dense<0.000000e+00> : vector<16x128xf32>
    %82 = tpu.matmul %81, %4, %cst_32 {dimension_numbers = #tpu.dot_dimension_numbers<[1], [0], [0], [1], [0, 0, 1, 1], [], []>} : vector<16x32xf32>, vector<32x128xf32>, vector<16x128xf32> -> vector<16x128xf32>
    %cst_33 = arith.constant dense<0.000000e+00> : vector<16x128xf32>
    %83 = tpu.matmul %0, %82, %cst_33 {dimension_numbers = #tpu.dot_dimension_numbers<[1], [0], [0], [1], [0, 0, 1, 1], [], []>} : vector<16x16xf32>, vector<16x128xf32>, vector<16x128xf32> -> vector<16x128xf32>
    %84 = vector.broadcast %8 : vector<1x128xf32> to vector<16x128xf32>
    %85 = arith.addf %83, %84 : vector<16x128xf32>
    %86 = arith.negf %85 : vector<16x128xf32>
    %87 = math.exp %86 : vector<16x128xf32>
    %cst_34 = arith.constant 1.000000e+00 : f32
    %88 = vector.broadcast %cst_34 : f32 to vector<16x128xf32>
    %89 = arith.addf %88, %87 : vector<16x128xf32>
    %90 = arith.divf %88, %89 : vector<16x128xf32>
    %c0_35 = arith.constant 0 : index
    %c0_36 = arith.constant 0 : index
    %91 = vector.load %arg4[%c0_35, %c0_36] : memref<16x128xf32, #tpu.memory_space<vmem>>, vector<16x128xf32>
    tpu.vector_store %arg4[%c0_35, %c0_36], %90 {strides = array<i32>} : memref<16x128xf32, #tpu.memory_space<vmem>>, vector<16x128xf32>,
    return
  }
}

</mosaic_0001>

<llo_original>
// kernel: tpu_custom_call.1
$region0: #{tpu_custom_call.1}
  #allocation0 [shape = 'u32[]', space=smem, size = 0x4, offset = 0x4, fixed_abs, tag = 'smem constant byte address 0x4 - core index']
  #allocation1 [shape = 'u32[144,128]{1,0:T(1,128)}', space=vmem, size = 0x12000, scoped, tag = 'internal scratch']
  %s0 = inlined_call_operand.vmem [shape: f32[16,16], index: 0, kind: input, shape index: {}]
  %s1 = inlined_call_operand.vmem [shape: f32[16,8], index: 1, kind: input, shape index: {}]
  %s2 = inlined_call_operand.hbm [shape: f32[104,128], index: 2, kind: input, shape index: {}]
  %s3 = inlined_call_operand.vmem [shape: f32[16,128], index: 3, kind: input, shape index: {}]
  %s4 = inlined_call_operand.hbm [shape: f32[16,128], index: 4, kind: output, shape index: {}]
  %s5 = sld [smem:[#allocation0]]
  $region30: #{tpu_custom_call.1} parent=0
    _
  %s7 = ssub.s32 1, %s5
  %s8 = scalar_select 0, %s7, %s5
  $region1: #{tpu_custom_call.1} parent=0
    #allocation2 [shape = 'u8[53248]{0}', space=vmem, size = 0xd000, scoped, tag = 'input window, operand 2, single buffered']
    #allocation3 [shape = 's32[1]{0}', space=sflag, size = 0x4, scoped, tag = 'scoped memory for tpu_custom_call.1']
    #allocation4 [shape = 's32[1]{0}', space=sflag, size = 0x4, scoped, tag = 'scoped memory for tpu_custom_call.1']
    #allocation5 [shape = 'u8[8192]{0}', space=vmem, size = 0x2000, scoped, tag = 'output window, operand 0, single buffered']
    %9 = vsyncpa [#allocation3], 0
    %10 = vsyncpa [#allocation4], 0
    // Predicated region
    $region2: #{tpu_custom_call.1} parent=1 // pred_check
      _
    $region3: #{tpu_custom_call.1} parent=1 // pred_check_branch
      %12 = sbr.rel (0) target = $region5
    $region4: #{tpu_custom_call.1} parent=1 // pred_region
      _
    $region5: #{tpu_custom_call.1} parent=1 // pred_fallthru
      _
    // Predicated region
    $region6: #{tpu_custom_call.1} parent=1 // pred_check
      _
    $region7: #{tpu_custom_call.1} parent=1 // pred_check_branch
      %14 = sbr.rel (0) target = $region9
    $region8: #{tpu_custom_call.1} parent=1 // pred_region
      _
    $region9: #{tpu_custom_call.1} parent=1 // pred_fallthru
      _
    // Predicated region
    $region10: #{tpu_custom_call.1} parent=1 // pred_check
      _
    $region11: #{tpu_custom_call.1} parent=1 // pred_check_branch
      %16 = sbr.rel (0) target = $region13
    $region12: #{tpu_custom_call.1} parent=1 // pred_region
      %s18 = ssub.s32 1664, 1664
      %19 = vsyncadd [#allocation3], %s18
      %s20 = sshll.u32 [#allocation2], 4
      %s21 = int_to_ptr.vmem [resolvable:$true] %s20
      %26 = dma.hbm_to_vmem [thread:$0]  %s2, 1664, %s21, [#allocation3], 128, 128, 8
    $region13: #{tpu_custom_call.1} parent=1 // pred_fallthru
      _
    // Predicated region
    $region14: #{tpu_custom_call.1} parent=1 // pred_check
      _
    $region15: #{tpu_custom_call.1} parent=1 // pred_check_branch
      %28 = sbr.rel (0) target = $region17
    $region16: #{tpu_custom_call.1} parent=1 // pred_region
      _
    $region17: #{tpu_custom_call.1} parent=1 // pred_fallthru
      _
    // Predicated region
    $region18: #{tpu_custom_call.1} parent=1 // pred_check
      _
    $region19: #{tpu_custom_call.1} parent=1 // pred_check_branch
      %30 = sbr.rel (0) target = $region21
    $region20: #{tpu_custom_call.1} parent=1 // pred_region
      %31 = dma.done [#allocation3], 1664
    $region21: #{tpu_custom_call.1} parent=1 // pred_fallthru
      _
    %v32 = vld [vmem:[%s0] sm:$0xff]
    %v33 = vld [vmem:[%s0 + $0x8] sm:$0xff]
    %v34 = vld [vmem:[#allocation2] sm:$0xff]
    %v35 = vld [vmem:[#allocation2 + $0x8] sm:$0xff]
    %v36 = vld [vmem:[#allocation2 + $0x10] sm:$0xff]
    %v37 = vld [vmem:[#allocation2 + $0x18] sm:$0xff]
    %v38 = vld [vmem:[#allocation2 + $0x20] sm:$0xff]
    %v39 = vld [vmem:[#allocation2 + $0x28] sm:$0xff]
    %v40 = vld [vmem:[#allocation2 + $0x30] sm:$0xff]
    %v41 = vld [vmem:[#allocation2 + $0x38] sm:$0xff]
    %v42 = vld [vmem:[#allocation2 + $0x40] sm:$0xff]
    %v43 = vld [vmem:[#allocation2 + $0x48] sm:$0xff]
    %v44 = vld [vmem:[#allocation2 + $0x50] sm:$0xff]
    %v45 = vld [vmem:[#allocation2 + $0x58] sm:$0xff]
    %v46 = vld [vmem:[#allocation2 + $0x60] sm:$0xff]
    %v47 = vld [vmem:[%s3] sm:$0x1]
    %v48 = vld [vmem:[%s3 + $0x1] sm:$0x1]
    %v49 = vld [vmem:[%s3 + $0x2] sm:$0x1]
    %v50 = vld [vmem:[%s3 + $0x3] sm:$0x1]
    %v51 = vld [vmem:[%s3 + $0x8] sm:$0xf]
    %v54 = vunpack.c.l.s4 1966171168
    %v55 = vunpack.c.0.s8 %v54
    %v56 = vlaneseq
    %v57 = vshrl.u32 %v56, 7
    %v58 = vsub.s32 %v55, %v57
    %v59 = vrot.slane %v51, %v58
    %v60 = vcombine.high %v59, %v59
    %v62 = vunpack.c.l.s4 1966171168
    %v63 = vunpack.c.0.s8 %v62
    %v64 = vlaneseq
    %v65 = vshrl.u32 %v64, 7
    %v66 = vsub.s32 %v63, %v65
    %v67 = vrot.slane %v59, %v66
    %v69 = vunpack.c.l.s4 1966171168
    %v70 = vunpack.c.0.s8 %v69
    %v71 = vlaneseq
    %v72 = vshrl.u32 %v71, 7
    %v73 = vsub.s32 %v70, %v72
    %v74 = vrot.slane %v60, %v73
    %v75 = vcombine.high %v67, %v67
    %v76 = vcombine.high %v74, %v74
    %v77 = vld [vmem:[%s1] sm:$0xff]
    %v78 = vld [vmem:[%s1 + $0x8] sm:$0xff]
    %vm79 = vcmask 130048
    %v81 = vsel %vm79, %v32, 0
    %v84 = vsel %vm79, %v33, 0
    %86 = vmatprep.subr.mxu0 0.0
    %87 = vmatpush1.msra.mxu0 %v77
    %88 = vmatprep.subr.mxu0 0.0
    %89 = vmatpush1.msra.mxu0 %v78
    %90 = vmatprep.subr.mxu0 0.0
    %91 = vmatpush1.msra.mxu0 0.0
    %92 = vmatprep.subr.mxu0 0.0
    %93 = vmatpush1.msra.mxu0 0.0
    %94 = vmatprep.subr.mxu0 0.0
    %95 = vmatpush1.msra.mxu0 0.0
    %96 = vmatprep.subr.mxu0 0.0
    %97 = vmatpush1.msra.mxu0 0.0
    %98 = vmatprep.subr.mxu0 0.0
    %99 = vmatpush1.msra.mxu0 0.0
    %100 = vmatprep.subr.mxu0 0.0
    %101 = vmatpush1.msra.mxu0 0.0
    %102 = vmatprep.subr.mxu0 0.0
    %103 = vmatpush1.msra.mxu0 0.0
    %104 = vmatprep.subr.mxu0 0.0
    %105 = vmatpush1.msra.mxu0 0.0
    %106 = vmatprep.subr.mxu0 0.0
    %107 = vmatpush1.msra.mxu0 0.0
    %108 = vmatprep.subr.mxu0 0.0
    %109 = vmatpush1.msra.mxu0 0.0
    %110 = vmatprep.subr.mxu0 0.0
    %111 = vmatpush1.msra.mxu0 0.0
    %112 = vmatprep.subr.mxu0 0.0
    %113 = vmatpush1.msra.mxu0 0.0
    %114 = vmatprep.subr.mxu0 0.0
    %115 = vmatpush1.msra.mxu0 0.0
    %116 = vmatprep.subr.mxu0 0.0
    %117 = vmatpush1.msra.mxu0 0.0
    %118 = vmatprep.subr.mxu0 0.0
    %119 = vmatpush1.msra.mxu0 0.0
    %120 = vmatprep.subr.mxu0 0.0
    %121 = vmatpush1.msra.mxu0 0.0
    %122 = vmatprep.subr.mxu0 0.0
    %123 = vmatpush1.msra.mxu0 0.0
    %124 = vmatprep.subr.mxu0 0.0
    %125 = vmatpush1.msra.mxu0 0.0
    %126 = vmatprep.subr.mxu0 0.0
    %127 = vmatpush1.msra.mxu0 0.0
    %128 = vmatprep.subr.mxu0 0.0
    %129 = vmatpush1.msra.mxu0 0.0
    %130 = vmatprep.subr.mxu0 0.0
    %131 = vmatpush1.msra.mxu0 0.0
    %132 = vmatprep.subr.mxu0 0.0
    %133 = vmatpush1.msra.mxu0 0.0
    %134 = vmatprep.subr.mxu0 0.0
    %135 = vmatpush1.msra.mxu0 0.0
    %136 = vmatprep.subr.mxu0 0.0
    %137 = vmatpush1.msra.mxu0 0.0
    %138 = vmatprep.subr.mxu0 0.0
    %139 = vmatpush1.msra.mxu0 0.0
    %140 = vmatprep.subr.mxu0 0.0
    %141 = vmatpush1.msra.mxu0 0.0
    %142 = vmatprep.subr.mxu0 0.0
    %143 = vmatpush1.msra.mxu0 0.0
    %144 = vmatprep.subr.mxu0 0.0
    %145 = vmatpush1.msra.mxu0 0.0
    %146 = vmatprep.subr.mxu0 0.0
    %147 = vmatpush1.msra.mxu0 0.0
    %148 = vmatprep.subr.mxu0 0.0
    %149 = vmatpush1.msra.mxu0 0.0
    %150 = vmatprep.mubr.f32.mxu0 0.0
    %151 = vmatmul.mubr.f32.gmra.mrb[0].mxu0 %v81
    %v152 = vpop.f32.mrb[0].mxu0
    %v153 = vadd.f32 0.0, %v152
    %v154 = vpop.f32.mrb[0].mxu0
    %155 = vmatprep.mubr.f32.mxu0 0.0
    %156 = vmatmul.mubr.f32.gmra.mrb[0].mxu0 %v84
    %v157 = vpop.f32.mrb[0].mxu0
    %v158 = vadd.f32 0.0, %v157
    %v159 = vpop.f32.mrb[0].mxu0
    %160 = vdwg.mxu0
    %v161 = vlaneseq
    %v162 = vshrl.u32 %v161, 7
    %v163 = vsub.s32 0, %v162
    %v164 = vrot.slane %v47, %v163
    %vm165 = vcmask 64512
    %v167 = vsel %vm165, %v153, 0
    %v170 = vsel %vm165, %v158, 0
    %172 = vmatprep.subr.mxu0 0.0
    %173 = vmatpush1.msra.mxu0 %v34
    %174 = vmatprep.subr.mxu0 0.0
    %175 = vmatpush1.msra.mxu0 0.0
    %176 = vmatprep.subr.mxu0 0.0
    %177 = vmatpush1.msra.mxu0 0.0
    %178 = vmatprep.subr.mxu0 0.0
    %179 = vmatpush1.msra.mxu0 0.0
    %180 = vmatprep.subr.mxu0 0.0
    %181 = vmatpush1.msra.mxu0 0.0
    %182 = vmatprep.subr.mxu0 0.0
    %183 = vmatpush1.msra.mxu0 0.0
    %184 = vmatprep.subr.mxu0 0.0
    %185 = vmatpush1.msra.mxu0 0.0
    %186 = vmatprep.subr.mxu0 0.0
    %187 = vmatpush1.msra.mxu0 0.0
    %188 = vmatprep.subr.mxu0 0.0
    %189 = vmatpush1.msra.mxu0 0.0
    %190 = vmatprep.subr.mxu0 0.0
    %191 = vmatpush1.msra.mxu0 0.0
    %192 = vmatprep.subr.mxu0 0.0
    %193 = vmatpush1.msra.mxu0 0.0
    %194 = vmatprep.subr.mxu0 0.0
    %195 = vmatpush1.msra.mxu0 0.0
    %196 = vmatprep.subr.mxu0 0.0
    %197 = vmatpush1.msra.mxu0 0.0
    %198 = vmatprep.subr.mxu0 0.0
    %199 = vmatpush1.msra.mxu0 0.0
    %200 = vmatprep.subr.mxu0 0.0
    %201 = vmatpush1.msra.mxu0 0.0
    %202 = vmatprep.subr.mxu0 0.0
    %203 = vmatpush1.msra.mxu0 0.0
    %204 = vmatprep.subr.mxu0 0.0
    %205 = vmatpush1.msra.mxu0 0.0
    %206 = vmatprep.subr.mxu0 0.0
    %207 = vmatpush1.msra.mxu0 0.0
    %208 = vmatprep.subr.mxu0 0.0
    %209 = vmatpush1.msra.mxu0 0.0
    %210 = vmatprep.subr.mxu0 0.0
    %211 = vmatpush1.msra.mxu0 0.0
    %212 = vmatprep.subr.mxu0 0.0
    %213 = vmatpush1.msra.mxu0 0.0
    %214 = vmatprep.subr.mxu0 0.0
    %215 = vmatpush1.msra.mxu0 0.0
    %216 = vmatprep.subr.mxu0 0.0
    %217 = vmatpush1.msra.mxu0 0.0
    %218 = vmatprep.subr.mxu0 0.0
    %219 = vmatpush1.msra.mxu0 0.0
    %220 = vmatprep.subr.mxu0 0.0
    %221 = vmatpush1.msra.mxu0 0.0
    %222 = vmatprep.subr.mxu0 0.0
    %223 = vmatpush1.msra.mxu0 0.0
    %224 = vmatprep.subr.mxu0 0.0
    %225 = vmatpush1.msra.mxu0 0.0
    %226 = vmatprep.subr.mxu0 0.0
    %227 = vmatpush1.msra.mxu0 0.0
    %228 = vmatprep.subr.mxu0 0.0
    %229 = vmatpush1.msra.mxu0 0.0
    %230 = vmatprep.subr.mxu0 0.0
    %231 = vmatpush1.msra.mxu0 0.0
    %232 = vmatprep.subr.mxu0 0.0
    %233 = vmatpush1.msra.mxu0 0.0
    %234 = vmatprep.subr.mxu0 0.0
    %235 = vmatpush1.msra.mxu0 0.0
    %236 = vmatprep.mubr.f32.mxu0 0.0
    %237 = vmatmul.mubr.f32.gmra.mrb[0].mxu0 %v167
    %v238 = vpop.f32.mrb[0].mxu0
    %v239 = vadd.f32 %v164, %v238
    %v240 = vpop.f32.mrb[0].mxu0
    %241 = vmatprep.mubr.f32.mxu0 0.0
    %242 = vmatmul.mubr.f32.gmra.mrb[0].mxu0 %v170
    %v243 = vpop.f32.mrb[0].mxu0
    %v244 = vadd.f32 %v164, %v243
    %v245 = vpop.f32.mrb[0].mxu0
    %246 = vdwg.mxu0
    %249 = vrot.lane.b32.xlu0 %v239, 96
    %v250 = vpop.permute.xlu0 %249
    %251 = vrot.lane.b32.xlu0 %v244, 96
    %v252 = vpop.permute.xlu0 %251
    %255 = vxpose.xlu0.b32.start [1/16] %v250, 128
    %256 = vxpose.xlu0.b32.cont [2/16] %v252, 128
    %257 = vxpose.xlu0.b32.cont [3/16] 0.0, 128
    %258 = vxpose.xlu0.b32.cont [4/16] 0.0, 128
    %259 = vxpose.xlu0.b32.cont [5/16] 0.0, 128
    %260 = vxpose.xlu0.b32.cont [6/16] 0.0, 128
    %261 = vxpose.xlu0.b32.cont [7/16] 0.0, 128
    %262 = vxpose.xlu0.b32.cont [8/16] 0.0, 128
    %263 = vxpose.xlu0.b32.cont [9/16] 0.0, 128
    %264 = vxpose.xlu0.b32.cont [10/16] 0.0, 128
    %265 = vxpose.xlu0.b32.cont [11/16] 0.0, 128
    %266 = vxpose.xlu0.b32.cont [12/16] 0.0, 128
    %267 = vxpose.xlu0.b32.cont [13/16] 0.0, 128
    %268 = vxpose.xlu0.b32.cont [14/16] 0.0, 128
    %269 = vxpose.xlu0.b32.cont [15/16] 0.0, 128
    %270 = vxpose.xlu0.b32.end [16/16] 0.0, 128
    %v271 = vpop.trf.xlu0
    %v272 = vpop.trf.xlu0
    %v273 = vpop.trf.xlu0
    %v274 = vpop.trf.xlu0
    %v275 = vpop.trf.xlu0
    %v276 = vpop.trf.xlu0
    %v277 = vpop.trf.xlu0
    %v278 = vpop.trf.xlu0
    %v279 = vpop.trf.xlu0
    %v280 = vpop.trf.xlu0
    %v281 = vpop.trf.xlu0
    %v282 = vpop.trf.xlu0
    %v283 = vpop.trf.xlu0
    %v284 = vpop.trf.xlu0
    %v285 = vpop.trf.xlu0
    %v286 = vpop.trf.xlu0
    %v287 = vlaneseq
    %v288 = vshrl.u32 %v287, 7
    %v289 = vsub.s32 0, %v288
    %v290 = vrot.slane %v67, %v289
    %v291 = vlaneseq
    %v292 = vshrl.u32 %v291, 7
    %v293 = vsub.s32 0, %v292
    %v294 = vrot.slane %v74, %v293
    %v295 = vlaneseq
    %v296 = vshrl.u32 %v295, 7
    %v297 = vsub.s32 0, %v296
    %v298 = vrot.slane %v75, %v297
    %v299 = vlaneseq
    %v300 = vshrl.u32 %v299, 7
    %v301 = vsub.s32 0, %v300
    %v302 = vrot.slane %v76, %v301
    %v307 = vmul.f32 %v239, %v290
    %v308 = vmul.f32 %v244, %v290
    %v309 = vmul.f32 %v239, %v294
    %v310 = vmul.f32 %v244, %v294
    %v311 = vmul.f32 %v239, %v298
    %v312 = vmul.f32 %v244, %v298
    %v313 = vmul.f32 %v239, %v302
    %v314 = vmul.f32 %v244, %v302
    %315 = vrot.lane.b32.xlu0 %v290, 64
    %v316 = vpop.permute.xlu0 %315
    %317 = vrot.lane.b32.xlu0 %v294, 64
    %v318 = vpop.permute.xlu0 %317
    %319 = vrot.lane.b32.xlu0 %v298, 64
    %v320 = vpop.permute.xlu0 %319
    %321 = vrot.lane.b32.xlu0 %v302, 64
    %v322 = vpop.permute.xlu0 %321
    %v327 = vmul.f32 %v239, %v316
    %v328 = vmul.f32 %v244, %v316
    %v329 = vmul.f32 %v239, %v318
    %v330 = vmul.f32 %v244, %v318
    %v331 = vmul.f32 %v239, %v320
    %v332 = vmul.f32 %v244, %v320
    %v333 = vmul.f32 %v239, %v322
    %v334 = vmul.f32 %v244, %v322
    %vm335 = vcmask 261120
    %v337 = vsel %vm335, %v307, 0
    %v340 = vsel %vm335, %v308, 0
    %342 = vmatprep.subr.mxu0 0.0
    %343 = vmatpush1.msra.mxu0 %v271
    %344 = vmatprep.subr.mxu0 0.0
    %345 = vmatpush1.msra.mxu0 %v272
    %346 = vmatprep.subr.mxu0 0.0
    %347 = vmatpush1.msra.mxu0 %v273
    %348 = vmatprep.subr.mxu0 0.0
    %349 = vmatpush1.msra.mxu0 %v274
    %350 = vmatprep.subr.mxu0 0.0
    %351 = vmatpush1.msra.mxu0 0.0
    %352 = vmatprep.subr.mxu0 0.0
    %353 = vmatpush1.msra.mxu0 0.0
    %354 = vmatprep.subr.mxu0 0.0
    %355 = vmatpush1.msra.mxu0 0.0
    %356 = vmatprep.subr.mxu0 0.0
    %357 = vmatpush1.msra.mxu0 0.0
    %358 = vmatprep.subr.mxu0 0.0
    %359 = vmatpush1.msra.mxu0 0.0
    %360 = vmatprep.subr.mxu0 0.0
    %361 = vmatpush1.msra.mxu0 0.0
    %362 = vmatprep.subr.mxu0 0.0
    %363 = vmatpush1.msra.mxu0 0.0
    %364 = vmatprep.subr.mxu0 0.0
    %365 = vmatpush1.msra.mxu0 0.0
    %366 = vmatprep.subr.mxu0 0.0
    %367 = vmatpush1.msra.mxu0 0.0
    %368 = vmatprep.subr.mxu0 0.0
    %369 = vmatpush1.msra.mxu0 0.0
    %370 = vmatprep.subr.mxu0 0.0
    %371 = vmatpush1.msra.mxu0 0.0
    %372 = vmatprep.subr.mxu0 0.0
    %373 = vmatpush1.msra.mxu0 0.0
    %374 = vmatprep.subr.mxu0 0.0
    %375 = vmatpush1.msra.mxu0 0.0
    %376 = vmatprep.subr.mxu0 0.0
    %377 = vmatpush1.msra.mxu0 0.0
    %378 = vmatprep.subr.mxu0 0.0
    %379 = vmatpush1.msra.mxu0 0.0
    %380 = vmatprep.subr.mxu0 0.0
    %381 = vmatpush1.msra.mxu0 0.0
    %382 = vmatprep.subr.mxu0 0.0
    %383 = vmatpush1.msra.mxu0 0.0
    %384 = vmatprep.subr.mxu0 0.0
    %385 = vmatpush1.msra.mxu0 0.0
    %386 = vmatprep.subr.mxu0 0.0
    %387 = vmatpush1.msra.mxu0 0.0
    %388 = vmatprep.subr.mxu0 0.0
    %389 = vmatpush1.msra.mxu0 0.0
    %390 = vmatprep.subr.mxu0 0.0
    %391 = vmatpush1.msra.mxu0 0.0
    %392 = vmatprep.subr.mxu0 0.0
    %393 = vmatpush1.msra.mxu0 0.0
    %394 = vmatprep.subr.mxu0 0.0
    %395 = vmatpush1.msra.mxu0 0.0
    %396 = vmatprep.subr.mxu0 0.0
    %397 = vmatpush1.msra.mxu0 0.0
    %398 = vmatprep.subr.mxu0 0.0
    %399 = vmatpush1.msra.mxu0 0.0
    %400 = vmatprep.subr.mxu0 0.0
    %401 = vmatpush1.msra.mxu0 0.0
    %402 = vmatprep.subr.mxu0 0.0
    %403 = vmatpush1.msra.mxu0 0.0
    %404 = vmatprep.subr.mxu0 0.0
    %405 = vmatpush1.msra.mxu0 0.0
    %406 = vmatprep.mubr.f32.mxu0 0.0
    %407 = vmatmul.mubr.f32.gmra.mrb[0].mxu0 %v337
    %v408 = vpop.f32.mrb[0].mxu0
    %v409 = vadd.f32 0.0, %v408
    %v410 = vpop.f32.mrb[0].mxu0
    %411 = vmatprep.mubr.f32.mxu0 0.0
    %412 = vmatmul.mubr.f32.gmra.mrb[0].mxu0 %v340
    %v413 = vpop.f32.mrb[0].mxu0
    %v414 = vadd.f32 0.0, %v413
    %v415 = vpop.f32.mrb[0].mxu0
    %416 = vdwg.mxu0
    %v418 = vsel %vm335, %v309, 0
    %v421 = vsel %vm335, %v310, 0
    %423 = vmatprep.subr.mxu0 0.0
    %424 = vmatpush1.msra.mxu0 %v271
    %425 = vmatprep.subr.mxu0 0.0
    %426 = vmatpush1.msra.mxu0 %v272
    %427 = vmatprep.subr.mxu0 0.0
    %428 = vmatpush1.msra.mxu0 %v273
    %429 = vmatprep.subr.mxu0 0.0
    %430 = vmatpush1.msra.mxu0 %v274
    %431 = vmatprep.subr.mxu0 0.0
    %432 = vmatpush1.msra.mxu0 0.0
    %433 = vmatprep.subr.mxu0 0.0
    %434 = vmatpush1.msra.mxu0 0.0
    %435 = vmatprep.subr.mxu0 0.0
    %436 = vmatpush1.msra.mxu0 0.0
    %437 = vmatprep.subr.mxu0 0.0
    %438 = vmatpush1.msra.mxu0 0.0
    %439 = vmatprep.subr.mxu0 0.0
    %440 = vmatpush1.msra.mxu0 0.0
    %441 = vmatprep.subr.mxu0 0.0
    %442 = vmatpush1.msra.mxu0 0.0
    %443 = vmatprep.subr.mxu0 0.0
    %444 = vmatpush1.msra.mxu0 0.0
    %445 = vmatprep.subr.mxu0 0.0
    %446 = vmatpush1.msra.mxu0 0.0
    %447 = vmatprep.subr.mxu0 0.0
    %448 = vmatpush1.msra.mxu0 0.0
    %449 = vmatprep.subr.mxu0 0.0
    %450 = vmatpush1.msra.mxu0 0.0
    %451 = vmatprep.subr.mxu0 0.0
    %452 = vmatpush1.msra.mxu0 0.0
    %453 = vmatprep.subr.mxu0 0.0
    %454 = vmatpush1.msra.mxu0 0.0
    %455 = vmatprep.subr.mxu0 0.0
    %456 = vmatpush1.msra.mxu0 0.0
    %457 = vmatprep.subr.mxu0 0.0
    %458 = vmatpush1.msra.mxu0 0.0
    %459 = vmatprep.subr.mxu0 0.0
    %460 = vmatpush1.msra.mxu0 0.0
    %461 = vmatprep.subr.mxu0 0.0
    %462 = vmatpush1.msra.mxu0 0.0
    %463 = vmatprep.subr.mxu0 0.0
    %464 = vmatpush1.msra.mxu0 0.0
    %465 = vmatprep.subr.mxu0 0.0
    %466 = vmatpush1.msra.mxu0 0.0
    %467 = vmatprep.subr.mxu0 0.0
    %468 = vmatpush1.msra.mxu0 0.0
    %469 = vmatprep.subr.mxu0 0.0
    %470 = vmatpush1.msra.mxu0 0.0
    %471 = vmatprep.subr.mxu0 0.0
    %472 = vmatpush1.msra.mxu0 0.0
    %473 = vmatprep.subr.mxu0 0.0
    %474 = vmatpush1.msra.mxu0 0.0
    %475 = vmatprep.subr.mxu0 0.0
    %476 = vmatpush1.msra.mxu0 0.0
    %477 = vmatprep.subr.mxu0 0.0
    %478 = vmatpush1.msra.mxu0 0.0
    %479 = vmatprep.subr.mxu0 0.0
    %480 = vmatpush1.msra.mxu0 0.0
    %481 = vmatprep.subr.mxu0 0.0
    %482 = vmatpush1.msra.mxu0 0.0
    %483 = vmatprep.subr.mxu0 0.0
    %484 = vmatpush1.msra.mxu0 0.0
    %485 = vmatprep.subr.mxu0 0.0
    %486 = vmatpush1.msra.mxu0 0.0
    %487 = vmatprep.mubr.f32.mxu0 0.0
    %488 = vmatmul.mubr.f32.gmra.mrb[0].mxu0 %v418
    %v489 = vpop.f32.mrb[0].mxu0
    %v490 = vadd.f32 0.0, %v489
    %v491 = vpop.f32.mrb[0].mxu0
    %492 = vmatprep.mubr.f32.mxu0 0.0
    %493 = vmatmul.mubr.f32.gmra.mrb[0].mxu0 %v421
    %v494 = vpop.f32.mrb[0].mxu0
    %v495 = vadd.f32 0.0, %v494
    %v496 = vpop.f32.mrb[0].mxu0
    %497 = vdwg.mxu0
    %v499 = vsel %vm335, %v311, 0
    %v502 = vsel %vm335, %v312, 0
    %504 = vmatprep.subr.mxu0 0.0
    %505 = vmatpush1.msra.mxu0 %v271
    %506 = vmatprep.subr.mxu0 0.0
    %507 = vmatpush1.msra.mxu0 %v272
    %508 = vmatprep.subr.mxu0 0.0
    %509 = vmatpush1.msra.mxu0 %v273
    %510 = vmatprep.subr.mxu0 0.0
    %511 = vmatpush1.msra.mxu0 %v274
    %512 = vmatprep.subr.mxu0 0.0
    %513 = vmatpush1.msra.mxu0 0.0
    %514 = vmatprep.subr.mxu0 0.0
    %515 = vmatpush1.msra.mxu0 0.0
    %516 = vmatprep.subr.mxu0 0.0
    %517 = vmatpush1.msra.mxu0 0.0
    %518 = vmatprep.subr.mxu0 0.0
    %519 = vmatpush1.msra.mxu0 0.0
    %520 = vmatprep.subr.mxu0 0.0
    %521 = vmatpush1.msra.mxu0 0.0
    %522 = vmatprep.subr.mxu0 0.0
    %523 = vmatpush1.msra.mxu0 0.0
    %524 = vmatprep.subr.mxu0 0.0
    %525 = vmatpush1.msra.mxu0 0.0
    %526 = vmatprep.subr.mxu0 0.0
    %527 = vmatpush1.msra.mxu0 0.0
    %528 = vmatprep.subr.mxu0 0.0
    %529 = vmatpush1.msra.mxu0 0.0
    %530 = vmatprep.subr.mxu0 0.0
    %531 = vmatpush1.msra.mxu0 0.0
    %532 = vmatprep.subr.mxu0 0.0
    %533 = vmatpush1.msra.mxu0 0.0
    %534 = vmatprep.subr.mxu0 0.0
    %535 = vmatpush1.msra.mxu0 0.0
    %536 = vmatprep.subr.mxu0 0.0
    %537 = vmatpush1.msra.mxu0 0.0
    %538 = vmatprep.subr.mxu0 0.0
    %539 = vmatpush1.msra.mxu0 0.0
    %540 = vmatprep.subr.mxu0 0.0
    %541 = vmatpush1.msra.mxu0 0.0
    %542 = vmatprep.subr.mxu0 0.0
    %543 = vmatpush1.msra.mxu0 0.0
    %544 = vmatprep.subr.mxu0 0.0
    %545 = vmatpush1.msra.mxu0 0.0
    %546 = vmatprep.subr.mxu0 0.0
    %547 = vmatpush1.msra.mxu0 0.0
    %548 = vmatprep.subr.mxu0 0.0
    %549 = vmatpush1.msra.mxu0 0.0
    %550 = vmatprep.subr.mxu0 0.0
    %551 = vmatpush1.msra.mxu0 0.0
    %552 = vmatprep.subr.mxu0 0.0
    %553 = vmatpush1.msra.mxu0 0.0
    %554 = vmatprep.subr.mxu0 0.0
    %555 = vmatpush1.msra.mxu0 0.0
    %556 = vmatprep.subr.mxu0 0.0
    %557 = vmatpush1.msra.mxu0 0.0
    %558 = vmatprep.subr.mxu0 0.0
    %559 = vmatpush1.msra.mxu0 0.0
    %560 = vmatprep.subr.mxu0 0.0
    %561 = vmatpush1.msra.mxu0 0.0
    %562 = vmatprep.subr.mxu0 0.0
    %563 = vmatpush1.msra.mxu0 0.0
    %564 = vmatprep.subr.mxu0 0.0
    %565 = vmatpush1.msra.mxu0 0.0
    %566 = vmatprep.subr.mxu0 0.0
    %567 = vmatpush1.msra.mxu0 0.0
    %568 = vmatprep.mubr.f32.mxu0 0.0
    %569 = vmatmul.mubr.f32.gmra.mrb[0].mxu0 %v499
    %v570 = vpop.f32.mrb[0].mxu0
    %v571 = vadd.f32 0.0, %v570
    %v572 = vpop.f32.mrb[0].mxu0
    %573 = vmatprep.mubr.f32.mxu0 0.0
    %574 = vmatmul.mubr.f32.gmra.mrb[0].mxu0 %v502
    %v575 = vpop.f32.mrb[0].mxu0
    %v576 = vadd.f32 0.0, %v575
    %v577 = vpop.f32.mrb[0].mxu0
    %578 = vdwg.mxu0
    %v580 = vsel %vm335, %v313, 0
    %v583 = vsel %vm335, %v314, 0
    %585 = vmatprep.subr.mxu0 0.0
    %586 = vmatpush1.msra.mxu0 %v271
    %587 = vmatprep.subr.mxu0 0.0
    %588 = vmatpush1.msra.mxu0 %v272
    %589 = vmatprep.subr.mxu0 0.0
    %590 = vmatpush1.msra.mxu0 %v273
    %591 = vmatprep.subr.mxu0 0.0
    %592 = vmatpush1.msra.mxu0 %v274
    %593 = vmatprep.subr.mxu0 0.0
    %594 = vmatpush1.msra.mxu0 0.0
    %595 = vmatprep.subr.mxu0 0.0
    %596 = vmatpush1.msra.mxu0 0.0
    %597 = vmatprep.subr.mxu0 0.0
    %598 = vmatpush1.msra.mxu0 0.0
    %599 = vmatprep.subr.mxu0 0.0
    %600 = vmatpush1.msra.mxu0 0.0
    %601 = vmatprep.subr.mxu0 0.0
    %602 = vmatpush1.msra.mxu0 0.0
    %603 = vmatprep.subr.mxu0 0.0
    %604 = vmatpush1.msra.mxu0 0.0
    %605 = vmatprep.subr.mxu0 0.0
    %606 = vmatpush1.msra.mxu0 0.0
    %607 = vmatprep.subr.mxu0 0.0
    %608 = vmatpush1.msra.mxu0 0.0
    %609 = vmatprep.subr.mxu0 0.0
    %610 = vmatpush1.msra.mxu0 0.0
    %611 = vmatprep.subr.mxu0 0.0
    %612 = vmatpush1.msra.mxu0 0.0
    %613 = vmatprep.subr.mxu0 0.0
    %614 = vmatpush1.msra.mxu0 0.0
    %615 = vmatprep.subr.mxu0 0.0
    %616 = vmatpush1.msra.mxu0 0.0
    %617 = vmatprep.subr.mxu0 0.0
    %618 = vmatpush1.msra.mxu0 0.0
    %619 = vmatprep.subr.mxu0 0.0
    %620 = vmatpush1.msra.mxu0 0.0
    %621 = vmatprep.subr.mxu0 0.0
    %622 = vmatpush1.msra.mxu0 0.0
    %623 = vmatprep.subr.mxu0 0.0
    %624 = vmatpush1.msra.mxu0 0.0
    %625 = vmatprep.subr.mxu0 0.0
    %626 = vmatpush1.msra.mxu0 0.0
    %627 = vmatprep.subr.mxu0 0.0
    %628 = vmatpush1.msra.mxu0 0.0
    %629 = vmatprep.subr.mxu0 0.0
    %630 = vmatpush1.msra.mxu0 0.0
    %631 = vmatprep.subr.mxu0 0.0
    %632 = vmatpush1.msra.mxu0 0.0
    %633 = vmatprep.subr.mxu0 0.0
    %634 = vmatpush1.msra.mxu0 0.0
    %635 = vmatprep.subr.mxu0 0.0
    %636 = vmatpush1.msra.mxu0 0.0
    %637 = vmatprep.subr.mxu0 0.0
    %638 = vmatpush1.msra.mxu0 0.0
    %639 = vmatprep.subr.mxu0 0.0
    %640 = vmatpush1.msra.mxu0 0.0
    %641 = vmatprep.subr.mxu0 0.0
    %642 = vmatpush1.msra.mxu0 0.0
    %643 = vmatprep.subr.mxu0 0.0
    %644 = vmatpush1.msra.mxu0 0.0
    %645 = vmatprep.subr.mxu0 0.0
    %646 = vmatpush1.msra.mxu0 0.0
    %647 = vmatprep.subr.mxu0 0.0
    %648 = vmatpush1.msra.mxu0 0.0
    %649 = vmatprep.mubr.f32.mxu0 0.0
    %650 = vmatmul.mubr.f32.gmra.mrb[0].mxu0 %v580
    %v651 = vpop.f32.mrb[0].mxu0
    %v652 = vadd.f32 0.0, %v651
    %v653 = vpop.f32.mrb[0].mxu0
    %654 = vmatprep.mubr.f32.mxu0 0.0
    %655 = vmatmul.mubr.f32.gmra.mrb[0].mxu0 %v583
    %v656 = vpop.f32.mrb[0].mxu0
    %v657 = vadd.f32 0.0, %v656
    %v658 = vpop.f32.mrb[0].mxu0
    %659 = vdwg.mxu0
    %v660 = vsel %vm79, %v409, -inf
    %661 = vmax.xlane.f32.xlu0 %v660
    %v662 = vpop.xlane.xlu0 %661
    %v663 = vsel %vm79, %v414, -inf
    %664 = vmax.xlane.f32.xlu0 %v663
    %v665 = vpop.xlane.xlu0 %664
    %v666 = vsel %vm79, %v490, -inf
    %667 = vmax.xlane.f32.xlu0 %v666
    %v668 = vpop.xlane.xlu0 %667
    %v669 = vsel %vm79, %v495, -inf
    %670 = vmax.xlane.f32.xlu0 %v669
    %v671 = vpop.xlane.xlu0 %670
    %v672 = vsel %vm79, %v571, -inf
    %673 = vmax.xlane.f32.xlu0 %v672
    %v674 = vpop.xlane.xlu0 %673
    %v675 = vsel %vm79, %v576, -inf
    %676 = vmax.xlane.f32.xlu0 %v675
    %v677 = vpop.xlane.xlu0 %676
    %v678 = vsel %vm79, %v652, -inf
    %679 = vmax.xlane.f32.xlu0 %v678
    %v680 = vpop.xlane.xlu0 %679
    %v681 = vsel %vm79, %v657, -inf
    %682 = vmax.xlane.f32.xlu0 %v681
    %v683 = vpop.xlane.xlu0 %682
    %v684 = vsub.f32 %v409, %v662
    %v685 = vsub.f32 %v414, %v665
    %v686 = vsub.f32 %v490, %v668
    %v687 = vsub.f32 %v495, %v671
    %v688 = vsub.f32 %v571, %v674
    %v689 = vsub.f32 %v576, %v677
    %v690 = vsub.f32 %v652, %v680
    %v691 = vsub.f32 %v657, %v683
    %v692 = vmul.f32 %v684, 1.442695
    %v693 = vpow.pop %v692
    %v694 = vmul.f32 %v685, 1.442695
    %v695 = vpow.pop %v694
    %v696 = vmul.f32 %v686, 1.442695
    %v697 = vpow.pop %v696
    %v698 = vmul.f32 %v687, 1.442695
    %v699 = vpow.pop %v698
    %v700 = vmul.f32 %v688, 1.442695
    %v701 = vpow.pop %v700
    %v702 = vmul.f32 %v689, 1.442695
    %v703 = vpow.pop %v702
    %v704 = vmul.f32 %v690, 1.442695
    %v705 = vpow.pop %v704
    %v706 = vmul.f32 %v691, 1.442695
    %v707 = vpow.pop %v706
    %v708 = vsel %vm79, %v693, 0.0
    %709 = vadd.xlane.f32.xlu0 %v708
    %v710 = vpop.xlane.xlu0 %709
    %v711 = vsel %vm79, %v695, 0.0
    %712 = vadd.xlane.f32.xlu0 %v711
    %v713 = vpop.xlane.xlu0 %712
    %v714 = vsel %vm79, %v697, 0.0
    %715 = vadd.xlane.f32.xlu0 %v714
    %v716 = vpop.xlane.xlu0 %715
    %v717 = vsel %vm79, %v699, 0.0
    %718 = vadd.xlane.f32.xlu0 %v717
    %v719 = vpop.xlane.xlu0 %718
    %v720 = vsel %vm79, %v701, 0.0
    %721 = vadd.xlane.f32.xlu0 %v720
    %v722 = vpop.xlane.xlu0 %721
    %v723 = vsel %vm79, %v703, 0.0
    %724 = vadd.xlane.f32.xlu0 %v723
    %v725 = vpop.xlane.xlu0 %724
    %v726 = vsel %vm79, %v705, 0.0
    %727 = vadd.xlane.f32.xlu0 %v726
    %v728 = vpop.xlane.xlu0 %727
    %v729 = vsel %vm79, %v707, 0.0
    %730 = vadd.xlane.f32.xlu0 %v729
    %v731 = vpop.xlane.xlu0 %730
    %v732 = vrcp.pop %v710
    %v733 = vmul.f32 %v693, %v732
    %v734 = vrcp.pop %v713
    %v735 = vmul.f32 %v695, %v734
    %v736 = vrcp.pop %v716
    %v737 = vmul.f32 %v697, %v736
    %v738 = vrcp.pop %v719
    %v739 = vmul.f32 %v699, %v738
    %v740 = vrcp.pop %v722
    %v741 = vmul.f32 %v701, %v740
    %v742 = vrcp.pop %v725
    %v743 = vmul.f32 %v703, %v742
    %v744 = vrcp.pop %v728
    %v745 = vmul.f32 %v705, %v744
    %v746 = vrcp.pop %v731
    %v747 = vmul.f32 %v707, %v746
    %750 = vrot.lane.b32.xlu0 %v327, 64
    %v751 = vpop.permute.xlu0 %750
    %752 = vrot.lane.b32.xlu0 %v328, 64
    %v753 = vpop.permute.xlu0 %752
    %v757 = vsel %vm79, %v733, 0
    %v760 = vsel %vm79, %v735, 0
    %762 = vmatprep.subr.mxu0 0.0
    %763 = vmatpush1.msra.mxu0 %v751
    %764 = vmatprep.subr.mxu0 0.0
    %765 = vmatpush1.msra.mxu0 %v753
    %766 = vmatprep.subr.mxu0 0.0
    %767 = vmatpush1.msra.mxu0 0.0
    %768 = vmatprep.subr.mxu0 0.0
    %769 = vmatpush1.msra.mxu0 0.0
    %770 = vmatprep.subr.mxu0 0.0
    %771 = vmatpush1.msra.mxu0 0.0
    %772 = vmatprep.subr.mxu0 0.0
    %773 = vmatpush1.msra.mxu0 0.0
    %774 = vmatprep.subr.mxu0 0.0
    %775 = vmatpush1.msra.mxu0 0.0
    %776 = vmatprep.subr.mxu0 0.0
    %777 = vmatpush1.msra.mxu0 0.0
    %778 = vmatprep.subr.mxu0 0.0
    %779 = vmatpush1.msra.mxu0 0.0
    %780 = vmatprep.subr.mxu0 0.0
    %781 = vmatpush1.msra.mxu0 0.0
    %782 = vmatprep.subr.mxu0 0.0
    %783 = vmatpush1.msra.mxu0 0.0
    %784 = vmatprep.subr.mxu0 0.0
    %785 = vmatpush1.msra.mxu0 0.0
    %786 = vmatprep.subr.mxu0 0.0
    %787 = vmatpush1.msra.mxu0 0.0
    %788 = vmatprep.subr.mxu0 0.0
    %789 = vmatpush1.msra.mxu0 0.0
    %790 = vmatprep.subr.mxu0 0.0
    %791 = vmatpush1.msra.mxu0 0.0
    %792 = vmatprep.subr.mxu0 0.0
    %793 = vmatpush1.msra.mxu0 0.0
    %794 = vmatprep.subr.mxu0 0.0
    %795 = vmatpush1.msra.mxu0 0.0
    %796 = vmatprep.subr.mxu0 0.0
    %797 = vmatpush1.msra.mxu0 0.0
    %798 = vmatprep.subr.mxu0 0.0
    %799 = vmatpush1.msra.mxu0 0.0
    %800 = vmatprep.subr.mxu0 0.0
    %801 = vmatpush1.msra.mxu0 0.0
    %802 = vmatprep.subr.mxu0 0.0
    %803 = vmatpush1.msra.mxu0 0.0
    %804 = vmatprep.subr.mxu0 0.0
    %805 = vmatpush1.msra.mxu0 0.0
    %806 = vmatprep.subr.mxu0 0.0
    %807 = vmatpush1.msra.mxu0 0.0
    %808 = vmatprep.subr.mxu0 0.0
    %809 = vmatpush1.msra.mxu0 0.0
    %810 = vmatprep.subr.mxu0 0.0
    %811 = vmatpush1.msra.mxu0 0.0
    %812 = vmatprep.subr.mxu0 0.0
    %813 = vmatpush1.msra.mxu0 0.0
    %814 = vmatprep.subr.mxu0 0.0
    %815 = vmatpush1.msra.mxu0 0.0
    %816 = vmatprep.subr.mxu0 0.0
    %817 = vmatpush1.msra.mxu0 0.0
    %818 = vmatprep.subr.mxu0 0.0
    %819 = vmatpush1.msra.mxu0 0.0
    %820 = vmatprep.subr.mxu0 0.0
    %821 = vmatpush1.msra.mxu0 0.0
    %822 = vmatprep.subr.mxu0 0.0
    %823 = vmatpush1.msra.mxu0 0.0
    %824 = vmatprep.subr.mxu0 0.0
    %825 = vmatpush1.msra.mxu0 0.0
    %826 = vmatprep.mubr.f32.mxu0 0.0
    %827 = vmatmul.mubr.f32.gmra.mrb[0].mxu0 %v757
    %v828 = vpop.f32.mrb[0].mxu0
    %v829 = vadd.f32 0.0, %v828
    %v830 = vpop.f32.mrb[0].mxu0
    %831 = vmatprep.mubr.f32.mxu0 0.0
    %832 = vmatmul.mubr.f32.gmra.mrb[0].mxu0 %v760
    %v833 = vpop.f32.mrb[0].mxu0
    %v834 = vadd.f32 0.0, %v833
    %v835 = vpop.f32.mrb[0].mxu0
    %836 = vdwg.mxu0
    %839 = vrot.lane.b32.xlu0 %v329, 64
    %v840 = vpop.permute.xlu0 %839
    %841 = vrot.lane.b32.xlu0 %v330, 64
    %v842 = vpop.permute.xlu0 %841
    %v846 = vsel %vm79, %v737, 0
    %v849 = vsel %vm79, %v739, 0
    %851 = vmatprep.subr.mxu0 0.0
    %852 = vmatpush1.msra.mxu0 %v840
    %853 = vmatprep.subr.mxu0 0.0
    %854 = vmatpush1.msra.mxu0 %v842
    %855 = vmatprep.subr.mxu0 0.0
    %856 = vmatpush1.msra.mxu0 0.0
    %857 = vmatprep.subr.mxu0 0.0
    %858 = vmatpush1.msra.mxu0 0.0
    %859 = vmatprep.subr.mxu0 0.0
    %860 = vmatpush1.msra.mxu0 0.0
    %861 = vmatprep.subr.mxu0 0.0
    %862 = vmatpush1.msra.mxu0 0.0
    %863 = vmatprep.subr.mxu0 0.0
    %864 = vmatpush1.msra.mxu0 0.0
    %865 = vmatprep.subr.mxu0 0.0
    %866 = vmatpush1.msra.mxu0 0.0
    %867 = vmatprep.subr.mxu0 0.0
    %868 = vmatpush1.msra.mxu0 0.0
    %869 = vmatprep.subr.mxu0 0.0
    %870 = vmatpush1.msra.mxu0 0.0
    %871 = vmatprep.subr.mxu0 0.0
    %872 = vmatpush1.msra.mxu0 0.0
    %873 = vmatprep.subr.mxu0 0.0
    %874 = vmatpush1.msra.mxu0 0.0
    %875 = vmatprep.subr.mxu0 0.0
    %876 = vmatpush1.msra.mxu0 0.0
    %877 = vmatprep.subr.mxu0 0.0
    %878 = vmatpush1.msra.mxu0 0.0
    %879 = vmatprep.subr.mxu0 0.0
    %880 = vmatpush1.msra.mxu0 0.0
    %881 = vmatprep.subr.mxu0 0.0
    %882 = vmatpush1.msra.mxu0 0.0
    %883 = vmatprep.subr.mxu0 0.0
    %884 = vmatpush1.msra.mxu0 0.0
    %885 = vmatprep.subr.mxu0 0.0
    %886 = vmatpush1.msra.mxu0 0.0
    %887 = vmatprep.subr.mxu0 0.0
    %888 = vmatpush1.msra.mxu0 0.0
    %889 = vmatprep.subr.mxu0 0.0
    %890 = vmatpush1.msra.mxu0 0.0
    %891 = vmatprep.subr.mxu0 0.0
    %892 = vmatpush1.msra.mxu0 0.0
    %893 = vmatprep.subr.mxu0 0.0
    %894 = vmatpush1.msra.mxu0 0.0
    %895 = vmatprep.subr.mxu0 0.0
    %896 = vmatpush1.msra.mxu0 0.0
    %897 = vmatprep.subr.mxu0 0.0
    %898 = vmatpush1.msra.mxu0 0.0
    %899 = vmatprep.subr.mxu0 0.0
    %900 = vmatpush1.msra.mxu0 0.0
    %901 = vmatprep.subr.mxu0 0.0
    %902 = vmatpush1.msra.mxu0 0.0
    %903 = vmatprep.subr.mxu0 0.0
    %904 = vmatpush1.msra.mxu0 0.0
    %905 = vmatprep.subr.mxu0 0.0
    %906 = vmatpush1.msra.mxu0 0.0
    %907 = vmatprep.subr.mxu0 0.0
    %908 = vmatpush1.msra.mxu0 0.0
    %909 = vmatprep.subr.mxu0 0.0
    %910 = vmatpush1.msra.mxu0 0.0
    %911 = vmatprep.subr.mxu0 0.0
    %912 = vmatpush1.msra.mxu0 0.0
    %913 = vmatprep.subr.mxu0 0.0
    %914 = vmatpush1.msra.mxu0 0.0
    %915 = vmatprep.mubr.f32.mxu0 0.0
    %916 = vmatmul.mubr.f32.gmra.mrb[0].mxu0 %v846
    %v917 = vpop.f32.mrb[0].mxu0
    %v918 = vadd.f32 0.0, %v917
    %v919 = vpop.f32.mrb[0].mxu0
    %920 = vmatprep.mubr.f32.mxu0 0.0
    %921 = vmatmul.mubr.f32.gmra.mrb[0].mxu0 %v849
    %v922 = vpop.f32.mrb[0].mxu0
    %v923 = vadd.f32 0.0, %v922
    %v924 = vpop.f32.mrb[0].mxu0
    %925 = vdwg.mxu0
    %928 = vrot.lane.b32.xlu0 %v331, 64
    %v929 = vpop.permute.xlu0 %928
    %930 = vrot.lane.b32.xlu0 %v332, 64
    %v931 = vpop.permute.xlu0 %930
    %v935 = vsel %vm79, %v741, 0
    %v938 = vsel %vm79, %v743, 0
    %940 = vmatprep.subr.mxu0 0.0
    %941 = vmatpush1.msra.mxu0 %v929
    %942 = vmatprep.subr.mxu0 0.0
    %943 = vmatpush1.msra.mxu0 %v931
    %944 = vmatprep.subr.mxu0 0.0
    %945 = vmatpush1.msra.mxu0 0.0
    %946 = vmatprep.subr.mxu0 0.0
    %947 = vmatpush1.msra.mxu0 0.0
    %948 = vmatprep.subr.mxu0 0.0
    %949 = vmatpush1.msra.mxu0 0.0
    %950 = vmatprep.subr.mxu0 0.0
    %951 = vmatpush1.msra.mxu0 0.0
    %952 = vmatprep.subr.mxu0 0.0
    %953 = vmatpush1.msra.mxu0 0.0
    %954 = vmatprep.subr.mxu0 0.0
    %955 = vmatpush1.msra.mxu0 0.0
    %956 = vmatprep.subr.mxu0 0.0
    %957 = vmatpush1.msra.mxu0 0.0
    %958 = vmatprep.subr.mxu0 0.0
    %959 = vmatpush1.msra.mxu0 0.0
    %960 = vmatprep.subr.mxu0 0.0
    %961 = vmatpush1.msra.mxu0 0.0
    %962 = vmatprep.subr.mxu0 0.0
    %963 = vmatpush1.msra.mxu0 0.0
    %964 = vmatprep.subr.mxu0 0.0
    %965 = vmatpush1.msra.mxu0 0.0
    %966 = vmatprep.subr.mxu0 0.0
    %967 = vmatpush1.msra.mxu0 0.0
    %968 = vmatprep.subr.mxu0 0.0
    %969 = vmatpush1.msra.mxu0 0.0
    %970 = vmatprep.subr.mxu0 0.0
    %971 = vmatpush1.msra.mxu0 0.0
    %972 = vmatprep.subr.mxu0 0.0
    %973 = vmatpush1.msra.mxu0 0.0
    %974 = vmatprep.subr.mxu0 0.0
    %975 = vmatpush1.msra.mxu0 0.0
    %976 = vmatprep.subr.mxu0 0.0
    %977 = vmatpush1.msra.mxu0 0.0
    %978 = vmatprep.subr.mxu0 0.0
    %979 = vmatpush1.msra.mxu0 0.0
    %980 = vmatprep.subr.mxu0 0.0
    %981 = vmatpush1.msra.mxu0 0.0
    %982 = vmatprep.subr.mxu0 0.0
    %983 = vmatpush1.msra.mxu0 0.0
    %984 = vmatprep.subr.mxu0 0.0
    %985 = vmatpush1.msra.mxu0 0.0
    %986 = vmatprep.subr.mxu0 0.0
    %987 = vmatpush1.msra.mxu0 0.0
    %988 = vmatprep.subr.mxu0 0.0
    %989 = vmatpush1.msra.mxu0 0.0
    %990 = vmatprep.subr.mxu0 0.0
    %991 = vmatpush1.msra.mxu0 0.0
    %992 = vmatprep.subr.mxu0 0.0
    %993 = vmatpush1.msra.mxu0 0.0
    %994 = vmatprep.subr.mxu0 0.0
    %995 = vmatpush1.msra.mxu0 0.0
    %996 = vmatprep.subr.mxu0 0.0
    %997 = vmatpush1.msra.mxu0 0.0
    %998 = vmatprep.subr.mxu0 0.0
    %999 = vmatpush1.msra.mxu0 0.0
    %1000 = vmatprep.subr.mxu0 0.0
    %1001 = vmatpush1.msra.mxu0 0.0
    %1002 = vmatprep.subr.mxu0 0.0
    %1003 = vmatpush1.msra.mxu0 0.0
    %1004 = vmatprep.mubr.f32.mxu0 0.0
    %1005 = vmatmul.mubr.f32.gmra.mrb[0].mxu0 %v935
    %v1006 = vpop.f32.mrb[0].mxu0
    %v1007 = vadd.f32 0.0, %v1006
    %v1008 = vpop.f32.mrb[0].mxu0
    %1009 = vmatprep.mubr.f32.mxu0 0.0
    %1010 = vmatmul.mubr.f32.gmra.mrb[0].mxu0 %v938
    %v1011 = vpop.f32.mrb[0].mxu0
    %v1012 = vadd.f32 0.0, %v1011
    %v1013 = vpop.f32.mrb[0].mxu0
    %1014 = vdwg.mxu0
    %1017 = vrot.lane.b32.xlu0 %v333, 64
    %v1018 = vpop.permute.xlu0 %1017
    %1019 = vrot.lane.b32.xlu0 %v334, 64
    %v1020 = vpop.permute.xlu0 %1019
    %v1024 = vsel %vm79, %v745, 0
    %v1027 = vsel %vm79, %v747, 0
    %1029 = vmatprep.subr.mxu0 0.0
    %1030 = vmatpush1.msra.mxu0 %v1018
    %1031 = vmatprep.subr.mxu0 0.0
    %1032 = vmatpush1.msra.mxu0 %v1020
    %1033 = vmatprep.subr.mxu0 0.0
    %1034 = vmatpush1.msra.mxu0 0.0
    %1035 = vmatprep.subr.mxu0 0.0
    %1036 = vmatpush1.msra.mxu0 0.0
    %1037 = vmatprep.subr.mxu0 0.0
    %1038 = vmatpush1.msra.mxu0 0.0
    %1039 = vmatprep.subr.mxu0 0.0
    %1040 = vmatpush1.msra.mxu0 0.0
    %1041 = vmatprep.subr.mxu0 0.0
    %1042 = vmatpush1.msra.mxu0 0.0
    %1043 = vmatprep.subr.mxu0 0.0
    %1044 = vmatpush1.msra.mxu0 0.0
    %1045 = vmatprep.subr.mxu0 0.0
    %1046 = vmatpush1.msra.mxu0 0.0
    %1047 = vmatprep.subr.mxu0 0.0
    %1048 = vmatpush1.msra.mxu0 0.0
    %1049 = vmatprep.subr.mxu0 0.0
    %1050 = vmatpush1.msra.mxu0 0.0
    %1051 = vmatprep.subr.mxu0 0.0
    %1052 = vmatpush1.msra.mxu0 0.0
    %1053 = vmatprep.subr.mxu0 0.0
    %1054 = vmatpush1.msra.mxu0 0.0
    %1055 = vmatprep.subr.mxu0 0.0
    %1056 = vmatpush1.msra.mxu0 0.0
    %1057 = vmatprep.subr.mxu0 0.0
    %1058 = vmatpush1.msra.mxu0 0.0
    %1059 = vmatprep.subr.mxu0 0.0
    %1060 = vmatpush1.msra.mxu0 0.0
    %1061 = vmatprep.subr.mxu0 0.0
    %1062 = vmatpush1.msra.mxu0 0.0
    %1063 = vmatprep.subr.mxu0 0.0
    %1064 = vmatpush1.msra.mxu0 0.0
    %1065 = vmatprep.subr.mxu0 0.0
    %1066 = vmatpush1.msra.mxu0 0.0
    %1067 = vmatprep.subr.mxu0 0.0
    %1068 = vmatpush1.msra.mxu0 0.0
    %1069 = vmatprep.subr.mxu0 0.0
    %1070 = vmatpush1.msra.mxu0 0.0
    %1071 = vmatprep.subr.mxu0 0.0
    %1072 = vmatpush1.msra.mxu0 0.0
    %1073 = vmatprep.subr.mxu0 0.0
    %1074 = vmatpush1.msra.mxu0 0.0
    %1075 = vmatprep.subr.mxu0 0.0
    %1076 = vmatpush1.msra.mxu0 0.0
    %1077 = vmatprep.subr.mxu0 0.0
    %1078 = vmatpush1.msra.mxu0 0.0
    %1079 = vmatprep.subr.mxu0 0.0
    %1080 = vmatpush1.msra.mxu0 0.0
    %1081 = vmatprep.subr.mxu0 0.0
    %1082 = vmatpush1.msra.mxu0 0.0
    %1083 = vmatprep.subr.mxu0 0.0
    %1084 = vmatpush1.msra.mxu0 0.0
    %1085 = vmatprep.subr.mxu0 0.0
    %1086 = vmatpush1.msra.mxu0 0.0
    %1087 = vmatprep.subr.mxu0 0.0
    %1088 = vmatpush1.msra.mxu0 0.0
    %1089 = vmatprep.subr.mxu0 0.0
    %1090 = vmatpush1.msra.mxu0 0.0
    %1091 = vmatprep.subr.mxu0 0.0
    %1092 = vmatpush1.msra.mxu0 0.0
    %1093 = vmatprep.mubr.f32.mxu0 0.0
    %1094 = vmatmul.mubr.f32.gmra.mrb[0].mxu0 %v1024
    %v1095 = vpop.f32.mrb[0].mxu0
    %v1096 = vadd.f32 0.0, %v1095
    %v1097 = vpop.f32.mrb[0].mxu0
    %1098 = vmatprep.mubr.f32.mxu0 0.0
    %1099 = vmatmul.mubr.f32.gmra.mrb[0].mxu0 %v1027
    %v1100 = vpop.f32.mrb[0].mxu0
    %v1101 = vadd.f32 0.0, %v1100
    %v1102 = vpop.f32.mrb[0].mxu0
    %1103 = vdwg.mxu0
    %v1104 = vsel %vm335, %v829, 0.0
    %v1105 = vsel %vm335, %v918, 0.0
    %v1106 = vadd.f32 %v1104, %v1105
    %v1107 = vsel %vm335, %v1007, 0.0
    %v1108 = vadd.f32 %v1106, %v1107
    %v1109 = vsel %vm335, %v1096, 0.0
    %v1110 = vadd.f32 %v1108, %v1109
    %v1111 = vsel %vm335, %v834, 0.0
    %v1112 = vsel %vm335, %v923, 0.0
    %v1113 = vadd.f32 %v1111, %v1112
    %v1114 = vsel %vm335, %v1012, 0.0
    %v1115 = vadd.f32 %v1113, %v1114
    %v1116 = vsel %vm335, %v1101, 0.0
    %v1117 = vadd.f32 %v1115, %v1116
    %v1118 = vlaneseq
    %v1119 = vshrl.u32 %v1118, 7
    %v1120 = vsub.s32 0, %v1119
    %v1121 = vrot.slane %v49, %v1120
    %v1123 = vsel %vm335, %v1110, 0
    %v1126 = vsel %vm335, %v1117, 0
    %1128 = vmatprep.subr.mxu0 0.0
    %1129 = vmatpush1.msra.mxu0 %v39
    %1130 = vmatprep.subr.mxu0 0.0
    %1131 = vmatpush1.msra.mxu0 %v40
    %1132 = vmatprep.subr.mxu0 0.0
    %1133 = vmatpush1.msra.mxu0 %v41
    %1134 = vmatprep.subr.mxu0 0.0
    %1135 = vmatpush1.msra.mxu0 %v42
    %1136 = vmatprep.subr.mxu0 0.0
    %1137 = vmatpush1.msra.mxu0 0.0
    %1138 = vmatprep.subr.mxu0 0.0
    %1139 = vmatpush1.msra.mxu0 0.0
    %1140 = vmatprep.subr.mxu0 0.0
    %1141 = vmatpush1.msra.mxu0 0.0
    %1142 = vmatprep.subr.mxu0 0.0
    %1143 = vmatpush1.msra.mxu0 0.0
    %1144 = vmatprep.subr.mxu0 0.0
    %1145 = vmatpush1.msra.mxu0 0.0
    %1146 = vmatprep.subr.mxu0 0.0
    %1147 = vmatpush1.msra.mxu0 0.0
    %1148 = vmatprep.subr.mxu0 0.0
    %1149 = vmatpush1.msra.mxu0 0.0
    %1150 = vmatprep.subr.mxu0 0.0
    %1151 = vmatpush1.msra.mxu0 0.0
    %1152 = vmatprep.subr.mxu0 0.0
    %1153 = vmatpush1.msra.mxu0 0.0
    %1154 = vmatprep.subr.mxu0 0.0
    %1155 = vmatpush1.msra.mxu0 0.0
    %1156 = vmatprep.subr.mxu0 0.0
    %1157 = vmatpush1.msra.mxu0 0.0
    %1158 = vmatprep.subr.mxu0 0.0
    %1159 = vmatpush1.msra.mxu0 0.0
    %1160 = vmatprep.subr.mxu0 0.0
    %1161 = vmatpush1.msra.mxu0 0.0
    %1162 = vmatprep.subr.mxu0 0.0
    %1163 = vmatpush1.msra.mxu0 0.0
    %1164 = vmatprep.subr.mxu0 0.0
    %1165 = vmatpush1.msra.mxu0 0.0
    %1166 = vmatprep.subr.mxu0 0.0
    %1167 = vmatpush1.msra.mxu0 0.0
    %1168 = vmatprep.subr.mxu0 0.0
    %1169 = vmatpush1.msra.mxu0 0.0
    %1170 = vmatprep.subr.mxu0 0.0
    %1171 = vmatpush1.msra.mxu0 0.0
    %1172 = vmatprep.subr.mxu0 0.0
    %1173 = vmatpush1.msra.mxu0 0.0
    %1174 = vmatprep.subr.mxu0 0.0
    %1175 = vmatpush1.msra.mxu0 0.0
    %1176 = vmatprep.subr.mxu0 0.0
    %1177 = vmatpush1.msra.mxu0 0.0
    %1178 = vmatprep.subr.mxu0 0.0
    %1179 = vmatpush1.msra.mxu0 0.0
    %1180 = vmatprep.subr.mxu0 0.0
    %1181 = vmatpush1.msra.mxu0 0.0
    %1182 = vmatprep.subr.mxu0 0.0
    %1183 = vmatpush1.msra.mxu0 0.0
    %1184 = vmatprep.subr.mxu0 0.0
    %1185 = vmatpush1.msra.mxu0 0.0
    %1186 = vmatprep.subr.mxu0 0.0
    %1187 = vmatpush1.msra.mxu0 0.0
    %1188 = vmatprep.subr.mxu0 0.0
    %1189 = vmatpush1.msra.mxu0 0.0
    %1190 = vmatprep.subr.mxu0 0.0
    %1191 = vmatpush1.msra.mxu0 0.0
    %1192 = vmatprep.mubr.f32.mxu0 0.0
    %1193 = vmatmul.mubr.f32.gmra.mrb[0].mxu0 %v1123
    %v1194 = vpop.f32.mrb[0].mxu0
    %v1195 = vadd.f32 %v1121, %v1194
    %v1196 = vpop.f32.mrb[0].mxu0
    %1197 = vmatprep.mubr.f32.mxu0 0.0
    %1198 = vmatmul.mubr.f32.gmra.mrb[0].mxu0 %v1126
    %v1199 = vpop.f32.mrb[0].mxu0
    %v1200 = vadd.f32 %v1121, %v1199
    %v1201 = vpop.f32.mrb[0].mxu0
    %1202 = vdwg.mxu0
    %v1203 = vmax.f32 %v1195, 0.0
    %v1204 = vmax.f32 %v1200, 0.0
    %1205 = vmatprep.subr.mxu0 0.0
    %1206 = vmatpush1.msra.mxu0 %v1203
    %1207 = vmatprep.subr.mxu0 0.0
    %1208 = vmatpush1.msra.mxu0 %v1204
    %1209 = vmatprep.subr.mxu0 0.0
    %1210 = vmatpush1.msra.mxu0 0.0
    %1211 = vmatprep.subr.mxu0 0.0
    %1212 = vmatpush1.msra.mxu0 0.0
    %1213 = vmatprep.subr.mxu0 0.0
    %1214 = vmatpush1.msra.mxu0 0.0
    %1215 = vmatprep.subr.mxu0 0.0
    %1216 = vmatpush1.msra.mxu0 0.0
    %1217 = vmatprep.subr.mxu0 0.0
    %1218 = vmatpush1.msra.mxu0 0.0
    %1219 = vmatprep.subr.mxu0 0.0
    %1220 = vmatpush1.msra.mxu0 0.0
    %1221 = vmatprep.subr.mxu0 0.0
    %1222 = vmatpush1.msra.mxu0 0.0
    %1223 = vmatprep.subr.mxu0 0.0
    %1224 = vmatpush1.msra.mxu0 0.0
    %1225 = vmatprep.subr.mxu0 0.0
    %1226 = vmatpush1.msra.mxu0 0.0
    %1227 = vmatprep.subr.mxu0 0.0
    %1228 = vmatpush1.msra.mxu0 0.0
    %1229 = vmatprep.subr.mxu0 0.0
    %1230 = vmatpush1.msra.mxu0 0.0
    %1231 = vmatprep.subr.mxu0 0.0
    %1232 = vmatpush1.msra.mxu0 0.0
    %1233 = vmatprep.subr.mxu0 0.0
    %1234 = vmatpush1.msra.mxu0 0.0
    %1235 = vmatprep.subr.mxu0 0.0
    %1236 = vmatpush1.msra.mxu0 0.0
    %1237 = vmatprep.subr.mxu0 0.0
    %1238 = vmatpush1.msra.mxu0 0.0
    %1239 = vmatprep.subr.mxu0 0.0
    %1240 = vmatpush1.msra.mxu0 0.0
    %1241 = vmatprep.subr.mxu0 0.0
    %1242 = vmatpush1.msra.mxu0 0.0
    %1243 = vmatprep.subr.mxu0 0.0
    %1244 = vmatpush1.msra.mxu0 0.0
    %1245 = vmatprep.subr.mxu0 0.0
    %1246 = vmatpush1.msra.mxu0 0.0
    %1247 = vmatprep.subr.mxu0 0.0
    %1248 = vmatpush1.msra.mxu0 0.0
    %1249 = vmatprep.subr.mxu0 0.0
    %1250 = vmatpush1.msra.mxu0 0.0
    %1251 = vmatprep.subr.mxu0 0.0
    %1252 = vmatpush1.msra.mxu0 0.0
    %1253 = vmatprep.subr.mxu0 0.0
    %1254 = vmatpush1.msra.mxu0 0.0
    %1255 = vmatprep.subr.mxu0 0.0
    %1256 = vmatpush1.msra.mxu0 0.0
    %1257 = vmatprep.subr.mxu0 0.0
    %1258 = vmatpush1.msra.mxu0 0.0
    %1259 = vmatprep.subr.mxu0 0.0
    %1260 = vmatpush1.msra.mxu0 0.0
    %1261 = vmatprep.subr.mxu0 0.0
    %1262 = vmatpush1.msra.mxu0 0.0
    %1263 = vmatprep.subr.mxu0 0.0
    %1264 = vmatpush1.msra.mxu0 0.0
    %1265 = vmatprep.subr.mxu0 0.0
    %1266 = vmatpush1.msra.mxu0 0.0
    %1267 = vmatprep.subr.mxu0 0.0
    %1268 = vmatpush1.msra.mxu0 0.0
    %1269 = vmatprep.mubr.f32.mxu0 0.0
    %1270 = vmatmul.mubr.f32.gmra.mrb[0].mxu0 %v81
    %v1271 = vpop.f32.mrb[0].mxu0
    %v1272 = vadd.f32 0.0, %v1271
    %v1273 = vpop.f32.mrb[0].mxu0
    %1274 = vmatprep.mubr.f32.mxu0 0.0
    %1275 = vmatmul.mubr.f32.gmra.mrb[0].mxu0 %v84
    %v1276 = vpop.f32.mrb[0].mxu0
    %v1277 = vadd.f32 0.0, %v1276
    %v1278 = vpop.f32.mrb[0].mxu0
    %1279 = vdwg.mxu0
    %v1280 = vlaneseq
    %v1281 = vshrl.u32 %v1280, 7
    %v1282 = vsub.s32 0, %v1281
    %v1283 = vrot.slane %v48, %v1282
    %v1285 = vsel %vm335, %v1272, 0
    %v1288 = vsel %vm335, %v1277, 0
    %1290 = vmatprep.subr.mxu0 0.0
    %1291 = vmatpush1.msra.mxu0 %v35
    %1292 = vmatprep.subr.mxu0 0.0
    %1293 = vmatpush1.msra.mxu0 %v36
    %1294 = vmatprep.subr.mxu0 0.0
    %1295 = vmatpush1.msra.mxu0 %v37
    %1296 = vmatprep.subr.mxu0 0.0
    %1297 = vmatpush1.msra.mxu0 %v38
    %1298 = vmatprep.subr.mxu0 0.0
    %1299 = vmatpush1.msra.mxu0 0.0
    %1300 = vmatprep.subr.mxu0 0.0
    %1301 = vmatpush1.msra.mxu0 0.0
    %1302 = vmatprep.subr.mxu0 0.0
    %1303 = vmatpush1.msra.mxu0 0.0
    %1304 = vmatprep.subr.mxu0 0.0
    %1305 = vmatpush1.msra.mxu0 0.0
    %1306 = vmatprep.subr.mxu0 0.0
    %1307 = vmatpush1.msra.mxu0 0.0
    %1308 = vmatprep.subr.mxu0 0.0
    %1309 = vmatpush1.msra.mxu0 0.0
    %1310 = vmatprep.subr.mxu0 0.0
    %1311 = vmatpush1.msra.mxu0 0.0
    %1312 = vmatprep.subr.mxu0 0.0
    %1313 = vmatpush1.msra.mxu0 0.0
    %1314 = vmatprep.subr.mxu0 0.0
    %1315 = vmatpush1.msra.mxu0 0.0
    %1316 = vmatprep.subr.mxu0 0.0
    %1317 = vmatpush1.msra.mxu0 0.0
    %1318 = vmatprep.subr.mxu0 0.0
    %1319 = vmatpush1.msra.mxu0 0.0
    %1320 = vmatprep.subr.mxu0 0.0
    %1321 = vmatpush1.msra.mxu0 0.0
    %1322 = vmatprep.subr.mxu0 0.0
    %1323 = vmatpush1.msra.mxu0 0.0
    %1324 = vmatprep.subr.mxu0 0.0
    %1325 = vmatpush1.msra.mxu0 0.0
    %1326 = vmatprep.subr.mxu0 0.0
    %1327 = vmatpush1.msra.mxu0 0.0
    %1328 = vmatprep.subr.mxu0 0.0
    %1329 = vmatpush1.msra.mxu0 0.0
    %1330 = vmatprep.subr.mxu0 0.0
    %1331 = vmatpush1.msra.mxu0 0.0
    %1332 = vmatprep.subr.mxu0 0.0
    %1333 = vmatpush1.msra.mxu0 0.0
    %1334 = vmatprep.subr.mxu0 0.0
    %1335 = vmatpush1.msra.mxu0 0.0
    %1336 = vmatprep.subr.mxu0 0.0
    %1337 = vmatpush1.msra.mxu0 0.0
    %1338 = vmatprep.subr.mxu0 0.0
    %1339 = vmatpush1.msra.mxu0 0.0
    %1340 = vmatprep.subr.mxu0 0.0
    %1341 = vmatpush1.msra.mxu0 0.0
    %1342 = vmatprep.subr.mxu0 0.0
    %1343 = vmatpush1.msra.mxu0 0.0
    %1344 = vmatprep.subr.mxu0 0.0
    %1345 = vmatpush1.msra.mxu0 0.0
    %1346 = vmatprep.subr.mxu0 0.0
    %1347 = vmatpush1.msra.mxu0 0.0
    %1348 = vmatprep.subr.mxu0 0.0
    %1349 = vmatpush1.msra.mxu0 0.0
    %1350 = vmatprep.subr.mxu0 0.0
    %1351 = vmatpush1.msra.mxu0 0.0
    %1352 = vmatprep.subr.mxu0 0.0
    %1353 = vmatpush1.msra.mxu0 0.0
    %1354 = vmatprep.mubr.f32.mxu0 0.0
    %1355 = vmatmul.mubr.f32.gmra.mrb[0].mxu0 %v1285
    %v1356 = vpop.f32.mrb[0].mxu0
    %v1357 = vadd.f32 %v1283, %v1356
    %v1358 = vpop.f32.mrb[0].mxu0
    %1359 = vmatprep.mubr.f32.mxu0 0.0
    %1360 = vmatmul.mubr.f32.gmra.mrb[0].mxu0 %v1288
    %v1361 = vpop.f32.mrb[0].mxu0
    %v1362 = vadd.f32 %v1283, %v1361
    %v1363 = vpop.f32.mrb[0].mxu0
    %1364 = vdwg.mxu0
    %1367 = vrot.lane.b32.xlu0 %v1357, 96
    %v1368 = vpop.permute.xlu0 %1367
    %1369 = vrot.lane.b32.xlu0 %v1362, 96
    %v1370 = vpop.permute.xlu0 %1369
    %1373 = vxpose.xlu0.b32.start [1/16] %v1368, 128
    %1374 = vxpose.xlu0.b32.cont [2/16] %v1370, 128
    %1375 = vxpose.xlu0.b32.cont [3/16] 0.0, 128
    %1376 = vxpose.xlu0.b32.cont [4/16] 0.0, 128
    %1377 = vxpose.xlu0.b32.cont [5/16] 0.0, 128
    %1378 = vxpose.xlu0.b32.cont [6/16] 0.0, 128
    %1379 = vxpose.xlu0.b32.cont [7/16] 0.0, 128
    %1380 = vxpose.xlu0.b32.cont [8/16] 0.0, 128
    %1381 = vxpose.xlu0.b32.cont [9/16] 0.0, 128
    %1382 = vxpose.xlu0.b32.cont [10/16] 0.0, 128
    %1383 = vxpose.xlu0.b32.cont [11/16] 0.0, 128
    %1384 = vxpose.xlu0.b32.cont [12/16] 0.0, 128
    %1385 = vxpose.xlu0.b32.cont [13/16] 0.0, 128
    %1386 = vxpose.xlu0.b32.cont [14/16] 0.0, 128
    %1387 = vxpose.xlu0.b32.cont [15/16] 0.0, 128
    %1388 = vxpose.xlu0.b32.end [16/16] 0.0, 128
    %v1389 = vpop.trf.xlu0
    %v1390 = vpop.trf.xlu0
    %v1391 = vpop.trf.xlu0
    %v1392 = vpop.trf.xlu0
    %v1393 = vpop.trf.xlu0
    %v1394 = vpop.trf.xlu0
    %v1395 = vpop.trf.xlu0
    %v1396 = vpop.trf.xlu0
    %v1397 = vpop.trf.xlu0
    %v1398 = vpop.trf.xlu0
    %v1399 = vpop.trf.xlu0
    %v1400 = vpop.trf.xlu0
    %v1401 = vpop.trf.xlu0
    %v1402 = vpop.trf.xlu0
    %v1403 = vpop.trf.xlu0
    %v1404 = vpop.trf.xlu0
    %v1405 = vmul.f32 %v1357, %v290
    %v1406 = vmul.f32 %v1362, %v290
    %v1407 = vmul.f32 %v1357, %v294
    %v1408 = vmul.f32 %v1362, %v294
    %v1409 = vmul.f32 %v1357, %v298
    %v1410 = vmul.f32 %v1362, %v298
    %v1411 = vmul.f32 %v1357, %v302
    %v1412 = vmul.f32 %v1362, %v302
    %v1413 = vmul.f32 %v1357, %v316
    %v1414 = vmul.f32 %v1362, %v316
    %v1415 = vmul.f32 %v1357, %v318
    %v1416 = vmul.f32 %v1362, %v318
    %v1417 = vmul.f32 %v1357, %v320
    %v1418 = vmul.f32 %v1362, %v320
    %v1419 = vmul.f32 %v1357, %v322
    %v1420 = vmul.f32 %v1362, %v322
    %v1422 = vsel %vm335, %v1405, 0
    %v1425 = vsel %vm335, %v1406, 0
    %1427 = vmatprep.subr.mxu0 0.0
    %1428 = vmatpush1.msra.mxu0 %v1389
    %1429 = vmatprep.subr.mxu0 0.0
    %1430 = vmatpush1.msra.mxu0 %v1390
    %1431 = vmatprep.subr.mxu0 0.0
    %1432 = vmatpush1.msra.mxu0 %v1391
    %1433 = vmatprep.subr.mxu0 0.0
    %1434 = vmatpush1.msra.mxu0 %v1392
    %1435 = vmatprep.subr.mxu0 0.0
    %1436 = vmatpush1.msra.mxu0 0.0
    %1437 = vmatprep.subr.mxu0 0.0
    %1438 = vmatpush1.msra.mxu0 0.0
    %1439 = vmatprep.subr.mxu0 0.0
    %1440 = vmatpush1.msra.mxu0 0.0
    %1441 = vmatprep.subr.mxu0 0.0
    %1442 = vmatpush1.msra.mxu0 0.0
    %1443 = vmatprep.subr.mxu0 0.0
    %1444 = vmatpush1.msra.mxu0 0.0
    %1445 = vmatprep.subr.mxu0 0.0
    %1446 = vmatpush1.msra.mxu0 0.0
    %1447 = vmatprep.subr.mxu0 0.0
    %1448 = vmatpush1.msra.mxu0 0.0
    %1449 = vmatprep.subr.mxu0 0.0
    %1450 = vmatpush1.msra.mxu0 0.0
    %1451 = vmatprep.subr.mxu0 0.0
    %1452 = vmatpush1.msra.mxu0 0.0
    %1453 = vmatprep.subr.mxu0 0.0
    %1454 = vmatpush1.msra.mxu0 0.0
    %1455 = vmatprep.subr.mxu0 0.0
    %1456 = vmatpush1.msra.mxu0 0.0
    %1457 = vmatprep.subr.mxu0 0.0
    %1458 = vmatpush1.msra.mxu0 0.0
    %1459 = vmatprep.subr.mxu0 0.0
    %1460 = vmatpush1.msra.mxu0 0.0
    %1461 = vmatprep.subr.mxu0 0.0
    %1462 = vmatpush1.msra.mxu0 0.0
    %1463 = vmatprep.subr.mxu0 0.0
    %1464 = vmatpush1.msra.mxu0 0.0
    %1465 = vmatprep.subr.mxu0 0.0
    %1466 = vmatpush1.msra.mxu0 0.0
    %1467 = vmatprep.subr.mxu0 0.0
    %1468 = vmatpush1.msra.mxu0 0.0
    %1469 = vmatprep.subr.mxu0 0.0
    %1470 = vmatpush1.msra.mxu0 0.0
    %1471 = vmatprep.subr.mxu0 0.0
    %1472 = vmatpush1.msra.mxu0 0.0
    %1473 = vmatprep.subr.mxu0 0.0
    %1474 = vmatpush1.msra.mxu0 0.0
    %1475 = vmatprep.subr.mxu0 0.0
    %1476 = vmatpush1.msra.mxu0 0.0
    %1477 = vmatprep.subr.mxu0 0.0
    %1478 = vmatpush1.msra.mxu0 0.0
    %1479 = vmatprep.subr.mxu0 0.0
    %1480 = vmatpush1.msra.mxu0 0.0
    %1481 = vmatprep.subr.mxu0 0.0
    %1482 = vmatpush1.msra.mxu0 0.0
    %1483 = vmatprep.subr.mxu0 0.0
    %1484 = vmatpush1.msra.mxu0 0.0
    %1485 = vmatprep.subr.mxu0 0.0
    %1486 = vmatpush1.msra.mxu0 0.0
    %1487 = vmatprep.subr.mxu0 0.0
    %1488 = vmatpush1.msra.mxu0 0.0
    %1489 = vmatprep.subr.mxu0 0.0
    %1490 = vmatpush1.msra.mxu0 0.0
    %1491 = vmatprep.mubr.f32.mxu0 0.0
    %1492 = vmatmul.mubr.f32.gmra.mrb[0].mxu0 %v1422
    %v1493 = vpop.f32.mrb[0].mxu0
    %v1494 = vadd.f32 0.0, %v1493
    %v1495 = vpop.f32.mrb[0].mxu0
    %1496 = vmatprep.mubr.f32.mxu0 0.0
    %1497 = vmatmul.mubr.f32.gmra.mrb[0].mxu0 %v1425
    %v1498 = vpop.f32.mrb[0].mxu0
    %v1499 = vadd.f32 0.0, %v1498
    %v1500 = vpop.f32.mrb[0].mxu0
    %1501 = vdwg.mxu0
    %v1503 = vsel %vm335, %v1407, 0
    %v1506 = vsel %vm335, %v1408, 0
    %1508 = vmatprep.subr.mxu0 0.0
    %1509 = vmatpush1.msra.mxu0 %v1389
    %1510 = vmatprep.subr.mxu0 0.0
    %1511 = vmatpush1.msra.mxu0 %v1390
    %1512 = vmatprep.subr.mxu0 0.0
    %1513 = vmatpush1.msra.mxu0 %v1391
    %1514 = vmatprep.subr.mxu0 0.0
    %1515 = vmatpush1.msra.mxu0 %v1392
    %1516 = vmatprep.subr.mxu0 0.0
    %1517 = vmatpush1.msra.mxu0 0.0
    %1518 = vmatprep.subr.mxu0 0.0
    %1519 = vmatpush1.msra.mxu0 0.0
    %1520 = vmatprep.subr.mxu0 0.0
    %1521 = vmatpush1.msra.mxu0 0.0
    %1522 = vmatprep.subr.mxu0 0.0
    %1523 = vmatpush1.msra.mxu0 0.0
    %1524 = vmatprep.subr.mxu0 0.0
    %1525 = vmatpush1.msra.mxu0 0.0
    %1526 = vmatprep.subr.mxu0 0.0
    %1527 = vmatpush1.msra.mxu0 0.0
    %1528 = vmatprep.subr.mxu0 0.0
    %1529 = vmatpush1.msra.mxu0 0.0
    %1530 = vmatprep.subr.mxu0 0.0
    %1531 = vmatpush1.msra.mxu0 0.0
    %1532 = vmatprep.subr.mxu0 0.0
    %1533 = vmatpush1.msra.mxu0 0.0
    %1534 = vmatprep.subr.mxu0 0.0
    %1535 = vmatpush1.msra.mxu0 0.0
    %1536 = vmatprep.subr.mxu0 0.0
    %1537 = vmatpush1.msra.mxu0 0.0
    %1538 = vmatprep.subr.mxu0 0.0
    %1539 = vmatpush1.msra.mxu0 0.0
    %1540 = vmatprep.subr.mxu0 0.0
    %1541 = vmatpush1.msra.mxu0 0.0
    %1542 = vmatprep.subr.mxu0 0.0
    %1543 = vmatpush1.msra.mxu0 0.0
    %1544 = vmatprep.subr.mxu0 0.0
    %1545 = vmatpush1.msra.mxu0 0.0
    %1546 = vmatprep.subr.mxu0 0.0
    %1547 = vmatpush1.msra.mxu0 0.0
    %1548 = vmatprep.subr.mxu0 0.0
    %1549 = vmatpush1.msra.mxu0 0.0
    %1550 = vmatprep.subr.mxu0 0.0
    %1551 = vmatpush1.msra.mxu0 0.0
    %1552 = vmatprep.subr.mxu0 0.0
    %1553 = vmatpush1.msra.mxu0 0.0
    %1554 = vmatprep.subr.mxu0 0.0
    %1555 = vmatpush1.msra.mxu0 0.0
    %1556 = vmatprep.subr.mxu0 0.0
    %1557 = vmatpush1.msra.mxu0 0.0
    %1558 = vmatprep.subr.mxu0 0.0
    %1559 = vmatpush1.msra.mxu0 0.0
    %1560 = vmatprep.subr.mxu0 0.0
    %1561 = vmatpush1.msra.mxu0 0.0
    %1562 = vmatprep.subr.mxu0 0.0
    %1563 = vmatpush1.msra.mxu0 0.0
    %1564 = vmatprep.subr.mxu0 0.0
    %1565 = vmatpush1.msra.mxu0 0.0
    %1566 = vmatprep.subr.mxu0 0.0
    %1567 = vmatpush1.msra.mxu0 0.0
    %1568 = vmatprep.subr.mxu0 0.0
    %1569 = vmatpush1.msra.mxu0 0.0
    %1570 = vmatprep.subr.mxu0 0.0
    %1571 = vmatpush1.msra.mxu0 0.0
    %1572 = vmatprep.mubr.f32.mxu0 0.0
    %1573 = vmatmul.mubr.f32.gmra.mrb[0].mxu0 %v1503
    %v1574 = vpop.f32.mrb[0].mxu0
    %v1575 = vadd.f32 0.0, %v1574
    %v1576 = vpop.f32.mrb[0].mxu0
    %1577 = vmatprep.mubr.f32.mxu0 0.0
    %1578 = vmatmul.mubr.f32.gmra.mrb[0].mxu0 %v1506
    %v1579 = vpop.f32.mrb[0].mxu0
    %v1580 = vadd.f32 0.0, %v1579
    %v1581 = vpop.f32.mrb[0].mxu0
    %1582 = vdwg.mxu0
    %v1584 = vsel %vm335, %v1409, 0
    %v1587 = vsel %vm335, %v1410, 0
    %1589 = vmatprep.subr.mxu0 0.0
    %1590 = vmatpush1.msra.mxu0 %v1389
    %1591 = vmatprep.subr.mxu0 0.0
    %1592 = vmatpush1.msra.mxu0 %v1390
    %1593 = vmatprep.subr.mxu0 0.0
    %1594 = vmatpush1.msra.mxu0 %v1391
    %1595 = vmatprep.subr.mxu0 0.0
    %1596 = vmatpush1.msra.mxu0 %v1392
    %1597 = vmatprep.subr.mxu0 0.0
    %1598 = vmatpush1.msra.mxu0 0.0
    %1599 = vmatprep.subr.mxu0 0.0
    %1600 = vmatpush1.msra.mxu0 0.0
    %1601 = vmatprep.subr.mxu0 0.0
    %1602 = vmatpush1.msra.mxu0 0.0
    %1603 = vmatprep.subr.mxu0 0.0
    %1604 = vmatpush1.msra.mxu0 0.0
    %1605 = vmatprep.subr.mxu0 0.0
    %1606 = vmatpush1.msra.mxu0 0.0
    %1607 = vmatprep.subr.mxu0 0.0
    %1608 = vmatpush1.msra.mxu0 0.0
    %1609 = vmatprep.subr.mxu0 0.0
    %1610 = vmatpush1.msra.mxu0 0.0
    %1611 = vmatprep.subr.mxu0 0.0
    %1612 = vmatpush1.msra.mxu0 0.0
    %1613 = vmatprep.subr.mxu0 0.0
    %1614 = vmatpush1.msra.mxu0 0.0
    %1615 = vmatprep.subr.mxu0 0.0
    %1616 = vmatpush1.msra.mxu0 0.0
    %1617 = vmatprep.subr.mxu0 0.0
    %1618 = vmatpush1.msra.mxu0 0.0
    %1619 = vmatprep.subr.mxu0 0.0
    %1620 = vmatpush1.msra.mxu0 0.0
    %1621 = vmatprep.subr.mxu0 0.0
    %1622 = vmatpush1.msra.mxu0 0.0
    %1623 = vmatprep.subr.mxu0 0.0
    %1624 = vmatpush1.msra.mxu0 0.0
    %1625 = vmatprep.subr.mxu0 0.0
    %1626 = vmatpush1.msra.mxu0 0.0
    %1627 = vmatprep.subr.mxu0 0.0
    %1628 = vmatpush1.msra.mxu0 0.0
    %1629 = vmatprep.subr.mxu0 0.0
    %1630 = vmatpush1.msra.mxu0 0.0
    %1631 = vmatprep.subr.mxu0 0.0
    %1632 = vmatpush1.msra.mxu0 0.0
    %1633 = vmatprep.subr.mxu0 0.0
    %1634 = vmatpush1.msra.mxu0 0.0
    %1635 = vmatprep.subr.mxu0 0.0
    %1636 = vmatpush1.msra.mxu0 0.0
    %1637 = vmatprep.subr.mxu0 0.0
    %1638 = vmatpush1.msra.mxu0 0.0
    %1639 = vmatprep.subr.mxu0 0.0
    %1640 = vmatpush1.msra.mxu0 0.0
    %1641 = vmatprep.subr.mxu0 0.0
    %1642 = vmatpush1.msra.mxu0 0.0
    %1643 = vmatprep.subr.mxu0 0.0
    %1644 = vmatpush1.msra.mxu0 0.0
    %1645 = vmatprep.subr.mxu0 0.0
    %1646 = vmatpush1.msra.mxu0 0.0
    %1647 = vmatprep.subr.mxu0 0.0
    %1648 = vmatpush1.msra.mxu0 0.0
    %1649 = vmatprep.subr.mxu0 0.0
    %1650 = vmatpush1.msra.mxu0 0.0
    %1651 = vmatprep.subr.mxu0 0.0
    %1652 = vmatpush1.msra.mxu0 0.0
    %1653 = vmatprep.mubr.f32.mxu0 0.0
    %1654 = vmatmul.mubr.f32.gmra.mrb[0].mxu0 %v1584
    %v1655 = vpop.f32.mrb[0].mxu0
    %v1656 = vadd.f32 0.0, %v1655
    %v1657 = vpop.f32.mrb[0].mxu0
    %1658 = vmatprep.mubr.f32.mxu0 0.0
    %1659 = vmatmul.mubr.f32.gmra.mrb[0].mxu0 %v1587
    %v1660 = vpop.f32.mrb[0].mxu0
    %v1661 = vadd.f32 0.0, %v1660
    %v1662 = vpop.f32.mrb[0].mxu0
    %1663 = vdwg.mxu0
    %v1665 = vsel %vm335, %v1411, 0
    %v1668 = vsel %vm335, %v1412, 0
    %1670 = vmatprep.subr.mxu0 0.0
    %1671 = vmatpush1.msra.mxu0 %v1389
    %1672 = vmatprep.subr.mxu0 0.0
    %1673 = vmatpush1.msra.mxu0 %v1390
    %1674 = vmatprep.subr.mxu0 0.0
    %1675 = vmatpush1.msra.mxu0 %v1391
    %1676 = vmatprep.subr.mxu0 0.0
    %1677 = vmatpush1.msra.mxu0 %v1392
    %1678 = vmatprep.subr.mxu0 0.0
    %1679 = vmatpush1.msra.mxu0 0.0
    %1680 = vmatprep.subr.mxu0 0.0
    %1681 = vmatpush1.msra.mxu0 0.0
    %1682 = vmatprep.subr.mxu0 0.0
    %1683 = vmatpush1.msra.mxu0 0.0
    %1684 = vmatprep.subr.mxu0 0.0
    %1685 = vmatpush1.msra.mxu0 0.0
    %1686 = vmatprep.subr.mxu0 0.0
    %1687 = vmatpush1.msra.mxu0 0.0
    %1688 = vmatprep.subr.mxu0 0.0
    %1689 = vmatpush1.msra.mxu0 0.0
    %1690 = vmatprep.subr.mxu0 0.0
    %1691 = vmatpush1.msra.mxu0 0.0
    %1692 = vmatprep.subr.mxu0 0.0
    %1693 = vmatpush1.msra.mxu0 0.0
    %1694 = vmatprep.subr.mxu0 0.0
    %1695 = vmatpush1.msra.mxu0 0.0
    %1696 = vmatprep.subr.mxu0 0.0
    %1697 = vmatpush1.msra.mxu0 0.0
    %1698 = vmatprep.subr.mxu0 0.0
    %1699 = vmatpush1.msra.mxu0 0.0
    %1700 = vmatprep.subr.mxu0 0.0
    %1701 = vmatpush1.msra.mxu0 0.0
    %1702 = vmatprep.subr.mxu0 0.0
    %1703 = vmatpush1.msra.mxu0 0.0
    %1704 = vmatprep.subr.mxu0 0.0
    %1705 = vmatpush1.msra.mxu0 0.0
    %1706 = vmatprep.subr.mxu0 0.0
    %1707 = vmatpush1.msra.mxu0 0.0
    %1708 = vmatprep.subr.mxu0 0.0
    %1709 = vmatpush1.msra.mxu0 0.0
    %1710 = vmatprep.subr.mxu0 0.0
    %1711 = vmatpush1.msra.mxu0 0.0
    %1712 = vmatprep.subr.mxu0 0.0
    %1713 = vmatpush1.msra.mxu0 0.0
    %1714 = vmatprep.subr.mxu0 0.0
    %1715 = vmatpush1.msra.mxu0 0.0
    %1716 = vmatprep.subr.mxu0 0.0
    %1717 = vmatpush1.msra.mxu0 0.0
    %1718 = vmatprep.subr.mxu0 0.0
    %1719 = vmatpush1.msra.mxu0 0.0
    %1720 = vmatprep.subr.mxu0 0.0
    %1721 = vmatpush1.msra.mxu0 0.0
    %1722 = vmatprep.subr.mxu0 0.0
    %1723 = vmatpush1.msra.mxu0 0.0
    %1724 = vmatprep.subr.mxu0 0.0
    %1725 = vmatpush1.msra.mxu0 0.0
    %1726 = vmatprep.subr.mxu0 0.0
    %1727 = vmatpush1.msra.mxu0 0.0
    %1728 = vmatprep.subr.mxu0 0.0
    %1729 = vmatpush1.msra.mxu0 0.0
    %1730 = vmatprep.subr.mxu0 0.0
    %1731 = vmatpush1.msra.mxu0 0.0
    %1732 = vmatprep.subr.mxu0 0.0
    %1733 = vmatpush1.msra.mxu0 0.0
    %1734 = vmatprep.mubr.f32.mxu0 0.0
    %1735 = vmatmul.mubr.f32.gmra.mrb[0].mxu0 %v1665
    %v1736 = vpop.f32.mrb[0].mxu0
    %v1737 = vadd.f32 0.0, %v1736
    %v1738 = vpop.f32.mrb[0].mxu0
    %1739 = vmatprep.mubr.f32.mxu0 0.0
    %1740 = vmatmul.mubr.f32.gmra.mrb[0].mxu0 %v1668
    %v1741 = vpop.f32.mrb[0].mxu0
    %v1742 = vadd.f32 0.0, %v1741
    %v1743 = vpop.f32.mrb[0].mxu0
    %1744 = vdwg.mxu0
    %v1745 = vsel %vm79, %v1494, -inf
    %1746 = vmax.xlane.f32.xlu0 %v1745
    %v1747 = vpop.xlane.xlu0 %1746
    %v1748 = vsel %vm79, %v1499, -inf
    %1749 = vmax.xlane.f32.xlu0 %v1748
    %v1750 = vpop.xlane.xlu0 %1749
    %v1751 = vsel %vm79, %v1575, -inf
    %1752 = vmax.xlane.f32.xlu0 %v1751
    %v1753 = vpop.xlane.xlu0 %1752
    %v1754 = vsel %vm79, %v1580, -inf
    %1755 = vmax.xlane.f32.xlu0 %v1754
    %v1756 = vpop.xlane.xlu0 %1755
    %v1757 = vsel %vm79, %v1656, -inf
    %1758 = vmax.xlane.f32.xlu0 %v1757
    %v1759 = vpop.xlane.xlu0 %1758
    %v1760 = vsel %vm79, %v1661, -inf
    %1761 = vmax.xlane.f32.xlu0 %v1760
    %v1762 = vpop.xlane.xlu0 %1761
    %v1763 = vsel %vm79, %v1737, -inf
    %1764 = vmax.xlane.f32.xlu0 %v1763
    %v1765 = vpop.xlane.xlu0 %1764
    %v1766 = vsel %vm79, %v1742, -inf
    %1767 = vmax.xlane.f32.xlu0 %v1766
    %v1768 = vpop.xlane.xlu0 %1767
    %v1769 = vsub.f32 %v1494, %v1747
    %v1770 = vsub.f32 %v1499, %v1750
    %v1771 = vsub.f32 %v1575, %v1753
    %v1772 = vsub.f32 %v1580, %v1756
    %v1773 = vsub.f32 %v1656, %v1759
    %v1774 = vsub.f32 %v1661, %v1762
    %v1775 = vsub.f32 %v1737, %v1765
    %v1776 = vsub.f32 %v1742, %v1768
    %v1777 = vmul.f32 %v1769, 1.442695
    %v1778 = vpow.pop %v1777
    %v1779 = vmul.f32 %v1770, 1.442695
    %v1780 = vpow.pop %v1779
    %v1781 = vmul.f32 %v1771, 1.442695
    %v1782 = vpow.pop %v1781
    %v1783 = vmul.f32 %v1772, 1.442695
    %v1784 = vpow.pop %v1783
    %v1785 = vmul.f32 %v1773, 1.442695
    %v1786 = vpow.pop %v1785
    %v1787 = vmul.f32 %v1774, 1.442695
    %v1788 = vpow.pop %v1787
    %v1789 = vmul.f32 %v1775, 1.442695
    %v1790 = vpow.pop %v1789
    %v1791 = vmul.f32 %v1776, 1.442695
    %v1792 = vpow.pop %v1791
    %v1793 = vsel %vm79, %v1778, 0.0
    %1794 = vadd.xlane.f32.xlu0 %v1793
    %v1795 = vpop.xlane.xlu0 %1794
    %v1796 = vsel %vm79, %v1780, 0.0
    %1797 = vadd.xlane.f32.xlu0 %v1796
    %v1798 = vpop.xlane.xlu0 %1797
    %v1799 = vsel %vm79, %v1782, 0.0
    %1800 = vadd.xlane.f32.xlu0 %v1799
    %v1801 = vpop.xlane.xlu0 %1800
    %v1802 = vsel %vm79, %v1784, 0.0
    %1803 = vadd.xlane.f32.xlu0 %v1802
    %v1804 = vpop.xlane.xlu0 %1803
    %v1805 = vsel %vm79, %v1786, 0.0
    %1806 = vadd.xlane.f32.xlu0 %v1805
    %v1807 = vpop.xlane.xlu0 %1806
    %v1808 = vsel %vm79, %v1788, 0.0
    %1809 = vadd.xlane.f32.xlu0 %v1808
    %v1810 = vpop.xlane.xlu0 %1809
    %v1811 = vsel %vm79, %v1790, 0.0
    %1812 = vadd.xlane.f32.xlu0 %v1811
    %v1813 = vpop.xlane.xlu0 %1812
    %v1814 = vsel %vm79, %v1792, 0.0
    %1815 = vadd.xlane.f32.xlu0 %v1814
    %v1816 = vpop.xlane.xlu0 %1815
    %v1817 = vrcp.pop %v1795
    %v1818 = vmul.f32 %v1778, %v1817
    %v1819 = vrcp.pop %v1798
    %v1820 = vmul.f32 %v1780, %v1819
    %v1821 = vrcp.pop %v1801
    %v1822 = vmul.f32 %v1782, %v1821
    %v1823 = vrcp.pop %v1804
    %v1824 = vmul.f32 %v1784, %v1823
    %v1825 = vrcp.pop %v1807
    %v1826 = vmul.f32 %v1786, %v1825
    %v1827 = vrcp.pop %v1810
    %v1828 = vmul.f32 %v1788, %v1827
    %v1829 = vrcp.pop %v1813
    %v1830 = vmul.f32 %v1790, %v1829
    %v1831 = vrcp.pop %v1816
    %v1832 = vmul.f32 %v1792, %v1831
    %1835 = vrot.lane.b32.xlu0 %v1413, 64
    %v1836 = vpop.permute.xlu0 %1835
    %1837 = vrot.lane.b32.xlu0 %v1414, 64
    %v1838 = vpop.permute.xlu0 %1837
    %v1842 = vsel %vm79, %v1818, 0
    %v1845 = vsel %vm79, %v1820, 0
    %1847 = vmatprep.subr.mxu0 0.0
    %1848 = vmatpush1.msra.mxu0 %v1836
    %1849 = vmatprep.subr.mxu0 0.0
    %1850 = vmatpush1.msra.mxu0 %v1838
    %1851 = vmatprep.subr.mxu0 0.0
    %1852 = vmatpush1.msra.mxu0 0.0
    %1853 = vmatprep.subr.mxu0 0.0
    %1854 = vmatpush1.msra.mxu0 0.0
    %1855 = vmatprep.subr.mxu0 0.0
    %1856 = vmatpush1.msra.mxu0 0.0
    %1857 = vmatprep.subr.mxu0 0.0
    %1858 = vmatpush1.msra.mxu0 0.0
    %1859 = vmatprep.subr.mxu0 0.0
    %1860 = vmatpush1.msra.mxu0 0.0
    %1861 = vmatprep.subr.mxu0 0.0
    %1862 = vmatpush1.msra.mxu0 0.0
    %1863 = vmatprep.subr.mxu0 0.0
    %1864 = vmatpush1.msra.mxu0 0.0
    %1865 = vmatprep.subr.mxu0 0.0
    %1866 = vmatpush1.msra.mxu0 0.0
    %1867 = vmatprep.subr.mxu0 0.0
    %1868 = vmatpush1.msra.mxu0 0.0
    %1869 = vmatprep.subr.mxu0 0.0
    %1870 = vmatpush1.msra.mxu0 0.0
    %1871 = vmatprep.subr.mxu0 0.0
    %1872 = vmatpush1.msra.mxu0 0.0
    %1873 = vmatprep.subr.mxu0 0.0
    %1874 = vmatpush1.msra.mxu0 0.0
    %1875 = vmatprep.subr.mxu0 0.0
    %1876 = vmatpush1.msra.mxu0 0.0
    %1877 = vmatprep.subr.mxu0 0.0
    %1878 = vmatpush1.msra.mxu0 0.0
    %1879 = vmatprep.subr.mxu0 0.0
    %1880 = vmatpush1.msra.mxu0 0.0
    %1881 = vmatprep.subr.mxu0 0.0
    %1882 = vmatpush1.msra.mxu0 0.0
    %1883 = vmatprep.subr.mxu0 0.0
    %1884 = vmatpush1.msra.mxu0 0.0
    %1885 = vmatprep.subr.mxu0 0.0
    %1886 = vmatpush1.msra.mxu0 0.0
    %1887 = vmatprep.subr.mxu0 0.0
    %1888 = vmatpush1.msra.mxu0 0.0
    %1889 = vmatprep.subr.mxu0 0.0
    %1890 = vmatpush1.msra.mxu0 0.0
    %1891 = vmatprep.subr.mxu0 0.0
    %1892 = vmatpush1.msra.mxu0 0.0
    %1893 = vmatprep.subr.mxu0 0.0
    %1894 = vmatpush1.msra.mxu0 0.0
    %1895 = vmatprep.subr.mxu0 0.0
    %1896 = vmatpush1.msra.mxu0 0.0
    %1897 = vmatprep.subr.mxu0 0.0
    %1898 = vmatpush1.msra.mxu0 0.0
    %1899 = vmatprep.subr.mxu0 0.0
    %1900 = vmatpush1.msra.mxu0 0.0
    %1901 = vmatprep.subr.mxu0 0.0
    %1902 = vmatpush1.msra.mxu0 0.0
    %1903 = vmatprep.subr.mxu0 0.0
    %1904 = vmatpush1.msra.mxu0 0.0
    %1905 = vmatprep.subr.mxu0 0.0
    %1906 = vmatpush1.msra.mxu0 0.0
    %1907 = vmatprep.subr.mxu0 0.0
    %1908 = vmatpush1.msra.mxu0 0.0
    %1909 = vmatprep.subr.mxu0 0.0
    %1910 = vmatpush1.msra.mxu0 0.0
    %1911 = vmatprep.mubr.f32.mxu0 0.0
    %1912 = vmatmul.mubr.f32.gmra.mrb[0].mxu0 %v1842
    %v1913 = vpop.f32.mrb[0].mxu0
    %v1914 = vadd.f32 0.0, %v1913
    %v1915 = vpop.f32.mrb[0].mxu0
    %1916 = vmatprep.mubr.f32.mxu0 0.0
    %1917 = vmatmul.mubr.f32.gmra.mrb[0].mxu0 %v1845
    %v1918 = vpop.f32.mrb[0].mxu0
    %v1919 = vadd.f32 0.0, %v1918
    %v1920 = vpop.f32.mrb[0].mxu0
    %1921 = vdwg.mxu0
    %1924 = vrot.lane.b32.xlu0 %v1415, 64
    %v1925 = vpop.permute.xlu0 %1924
    %1926 = vrot.lane.b32.xlu0 %v1416, 64
    %v1927 = vpop.permute.xlu0 %1926
    %v1931 = vsel %vm79, %v1822, 0
    %v1934 = vsel %vm79, %v1824, 0
    %1936 = vmatprep.subr.mxu0 0.0
    %1937 = vmatpush1.msra.mxu0 %v1925
    %1938 = vmatprep.subr.mxu0 0.0
    %1939 = vmatpush1.msra.mxu0 %v1927
    %1940 = vmatprep.subr.mxu0 0.0
    %1941 = vmatpush1.msra.mxu0 0.0
    %1942 = vmatprep.subr.mxu0 0.0
    %1943 = vmatpush1.msra.mxu0 0.0
    %1944 = vmatprep.subr.mxu0 0.0
    %1945 = vmatpush1.msra.mxu0 0.0
    %1946 = vmatprep.subr.mxu0 0.0
    %1947 = vmatpush1.msra.mxu0 0.0
    %1948 = vmatprep.subr.mxu0 0.0
    %1949 = vmatpush1.msra.mxu0 0.0
    %1950 = vmatprep.subr.mxu0 0.0
    %1951 = vmatpush1.msra.mxu0 0.0
    %1952 = vmatprep.subr.mxu0 0.0
    %1953 = vmatpush1.msra.mxu0 0.0
    %1954 = vmatprep.subr.mxu0 0.0
    %1955 = vmatpush1.msra.mxu0 0.0
    %1956 = vmatprep.subr.mxu0 0.0
    %1957 = vmatpush1.msra.mxu0 0.0
    %1958 = vmatprep.subr.mxu0 0.0
    %1959 = vmatpush1.msra.mxu0 0.0
    %1960 = vmatprep.subr.mxu0 0.0
    %1961 = vmatpush1.msra.mxu0 0.0
    %1962 = vmatprep.subr.mxu0 0.0
    %1963 = vmatpush1.msra.mxu0 0.0
    %1964 = vmatprep.subr.mxu0 0.0
    %1965 = vmatpush1.msra.mxu0 0.0
    %1966 = vmatprep.subr.mxu0 0.0
    %1967 = vmatpush1.msra.mxu0 0.0
    %1968 = vmatprep.subr.mxu0 0.0
    %1969 = vmatpush1.msra.mxu0 0.0
    %1970 = vmatprep.subr.mxu0 0.0
    %1971 = vmatpush1.msra.mxu0 0.0
    %1972 = vmatprep.subr.mxu0 0.0
    %1973 = vmatpush1.msra.mxu0 0.0
    %1974 = vmatprep.subr.mxu0 0.0
    %1975 = vmatpush1.msra.mxu0 0.0
    %1976 = vmatprep.subr.mxu0 0.0
    %1977 = vmatpush1.msra.mxu0 0.0
    %1978 = vmatprep.subr.mxu0 0.0
    %1979 = vmatpush1.msra.mxu0 0.0
    %1980 = vmatprep.subr.mxu0 0.0
    %1981 = vmatpush1.msra.mxu0 0.0
    %1982 = vmatprep.subr.mxu0 0.0
    %1983 = vmatpush1.msra.mxu0 0.0
    %1984 = vmatprep.subr.mxu0 0.0
    %1985 = vmatpush1.msra.mxu0 0.0
    %1986 = vmatprep.subr.mxu0 0.0
    %1987 = vmatpush1.msra.mxu0 0.0
    %1988 = vmatprep.subr.mxu0 0.0
    %1989 = vmatpush1.msra.mxu0 0.0
    %1990 = vmatprep.subr.mxu0 0.0
    %1991 = vmatpush1.msra.mxu0 0.0
    %1992 = vmatprep.subr.mxu0 0.0
    %1993 = vmatpush1.msra.mxu0 0.0
    %1994 = vmatprep.subr.mxu0 0.0
    %1995 = vmatpush1.msra.mxu0 0.0
    %1996 = vmatprep.subr.mxu0 0.0
    %1997 = vmatpush1.msra.mxu0 0.0
    %1998 = vmatprep.subr.mxu0 0.0
    %1999 = vmatpush1.msra.mxu0 0.0
    %2000 = vmatprep.mubr.f32.mxu0 0.0
    %2001 = vmatmul.mubr.f32.gmra.mrb[0].mxu0 %v1931
    %v2002 = vpop.f32.mrb[0].mxu0
    %v2003 = vadd.f32 0.0, %v2002
    %v2004 = vpop.f32.mrb[0].mxu0
    %2005 = vmatprep.mubr.f32.mxu0 0.0
    %2006 = vmatmul.mubr.f32.gmra.mrb[0].mxu0 %v1934
    %v2007 = vpop.f32.mrb[0].mxu0
    %v2008 = vadd.f32 0.0, %v2007
    %v2009 = vpop.f32.mrb[0].mxu0
    %2010 = vdwg.mxu0
    %2013 = vrot.lane.b32.xlu0 %v1417, 64
    %v2014 = vpop.permute.xlu0 %2013
    %2015 = vrot.lane.b32.xlu0 %v1418, 64
    %v2016 = vpop.permute.xlu0 %2015
    %v2020 = vsel %vm79, %v1826, 0
    %v2023 = vsel %vm79, %v1828, 0
    %2025 = vmatprep.subr.mxu0 0.0
    %2026 = vmatpush1.msra.mxu0 %v2014
    %2027 = vmatprep.subr.mxu0 0.0
    %2028 = vmatpush1.msra.mxu0 %v2016
    %2029 = vmatprep.subr.mxu0 0.0
    %2030 = vmatpush1.msra.mxu0 0.0
    %2031 = vmatprep.subr.mxu0 0.0
    %2032 = vmatpush1.msra.mxu0 0.0
    %2033 = vmatprep.subr.mxu0 0.0
    %2034 = vmatpush1.msra.mxu0 0.0
    %2035 = vmatprep.subr.mxu0 0.0
    %2036 = vmatpush1.msra.mxu0 0.0
    %2037 = vmatprep.subr.mxu0 0.0
    %2038 = vmatpush1.msra.mxu0 0.0
    %2039 = vmatprep.subr.mxu0 0.0
    %2040 = vmatpush1.msra.mxu0 0.0
    %2041 = vmatprep.subr.mxu0 0.0
    %2042 = vmatpush1.msra.mxu0 0.0
    %2043 = vmatprep.subr.mxu0 0.0
    %2044 = vmatpush1.msra.mxu0 0.0
    %2045 = vmatprep.subr.mxu0 0.0
    %2046 = vmatpush1.msra.mxu0 0.0
    %2047 = vmatprep.subr.mxu0 0.0
    %2048 = vmatpush1.msra.mxu0 0.0
    %2049 = vmatprep.subr.mxu0 0.0
    %2050 = vmatpush1.msra.mxu0 0.0
    %2051 = vmatprep.subr.mxu0 0.0
    %2052 = vmatpush1.msra.mxu0 0.0
    %2053 = vmatprep.subr.mxu0 0.0
    %2054 = vmatpush1.msra.mxu0 0.0
    %2055 = vmatprep.subr.mxu0 0.0
    %2056 = vmatpush1.msra.mxu0 0.0
    %2057 = vmatprep.subr.mxu0 0.0
    %2058 = vmatpush1.msra.mxu0 0.0
    %2059 = vmatprep.subr.mxu0 0.0
    %2060 = vmatpush1.msra.mxu0 0.0
    %2061 = vmatprep.subr.mxu0 0.0
    %2062 = vmatpush1.msra.mxu0 0.0
    %2063 = vmatprep.subr.mxu0 0.0
    %2064 = vmatpush1.msra.mxu0 0.0
    %2065 = vmatprep.subr.mxu0 0.0
    %2066 = vmatpush1.msra.mxu0 0.0
    %2067 = vmatprep.subr.mxu0 0.0
    %2068 = vmatpush1.msra.mxu0 0.0
    %2069 = vmatprep.subr.mxu0 0.0
    %2070 = vmatpush1.msra.mxu0 0.0
    %2071 = vmatprep.subr.mxu0 0.0
    %2072 = vmatpush1.msra.mxu0 0.0
    %2073 = vmatprep.subr.mxu0 0.0
    %2074 = vmatpush1.msra.mxu0 0.0
    %2075 = vmatprep.subr.mxu0 0.0
    %2076 = vmatpush1.msra.mxu0 0.0
    %2077 = vmatprep.subr.mxu0 0.0
    %2078 = vmatpush1.msra.mxu0 0.0
    %2079 = vmatprep.subr.mxu0 0.0
    %2080 = vmatpush1.msra.mxu0 0.0
    %2081 = vmatprep.subr.mxu0 0.0
    %2082 = vmatpush1.msra.mxu0 0.0
    %2083 = vmatprep.subr.mxu0 0.0
    %2084 = vmatpush1.msra.mxu0 0.0
    %2085 = vmatprep.subr.mxu0 0.0
    %2086 = vmatpush1.msra.mxu0 0.0
    %2087 = vmatprep.subr.mxu0 0.0
    %2088 = vmatpush1.msra.mxu0 0.0
    %2089 = vmatprep.mubr.f32.mxu0 0.0
    %2090 = vmatmul.mubr.f32.gmra.mrb[0].mxu0 %v2020
    %v2091 = vpop.f32.mrb[0].mxu0
    %v2092 = vadd.f32 0.0, %v2091
    %v2093 = vpop.f32.mrb[0].mxu0
    %2094 = vmatprep.mubr.f32.mxu0 0.0
    %2095 = vmatmul.mubr.f32.gmra.mrb[0].mxu0 %v2023
    %v2096 = vpop.f32.mrb[0].mxu0
    %v2097 = vadd.f32 0.0, %v2096
    %v2098 = vpop.f32.mrb[0].mxu0
    %2099 = vdwg.mxu0
    %2102 = vrot.lane.b32.xlu0 %v1419, 64
    %v2103 = vpop.permute.xlu0 %2102
    %2104 = vrot.lane.b32.xlu0 %v1420, 64
    %v2105 = vpop.permute.xlu0 %2104
    %v2109 = vsel %vm79, %v1830, 0
    %v2112 = vsel %vm79, %v1832, 0
    %2114 = vmatprep.subr.mxu0 0.0
    %2115 = vmatpush1.msra.mxu0 %v2103
    %2116 = vmatprep.subr.mxu0 0.0
    %2117 = vmatpush1.msra.mxu0 %v2105
    %2118 = vmatprep.subr.mxu0 0.0
    %2119 = vmatpush1.msra.mxu0 0.0
    %2120 = vmatprep.subr.mxu0 0.0
    %2121 = vmatpush1.msra.mxu0 0.0
    %2122 = vmatprep.subr.mxu0 0.0
    %2123 = vmatpush1.msra.mxu0 0.0
    %2124 = vmatprep.subr.mxu0 0.0
    %2125 = vmatpush1.msra.mxu0 0.0
    %2126 = vmatprep.subr.mxu0 0.0
    %2127 = vmatpush1.msra.mxu0 0.0
    %2128 = vmatprep.subr.mxu0 0.0
    %2129 = vmatpush1.msra.mxu0 0.0
    %2130 = vmatprep.subr.mxu0 0.0
    %2131 = vmatpush1.msra.mxu0 0.0
    %2132 = vmatprep.subr.mxu0 0.0
    %2133 = vmatpush1.msra.mxu0 0.0
    %2134 = vmatprep.subr.mxu0 0.0
    %2135 = vmatpush1.msra.mxu0 0.0
    %2136 = vmatprep.subr.mxu0 0.0
    %2137 = vmatpush1.msra.mxu0 0.0
    %2138 = vmatprep.subr.mxu0 0.0
    %2139 = vmatpush1.msra.mxu0 0.0
    %2140 = vmatprep.subr.mxu0 0.0
    %2141 = vmatpush1.msra.mxu0 0.0
    %2142 = vmatprep.subr.mxu0 0.0
    %2143 = vmatpush1.msra.mxu0 0.0
    %2144 = vmatprep.subr.mxu0 0.0
    %2145 = vmatpush1.msra.mxu0 0.0
    %2146 = vmatprep.subr.mxu0 0.0
    %2147 = vmatpush1.msra.mxu0 0.0
    %2148 = vmatprep.subr.mxu0 0.0
    %2149 = vmatpush1.msra.mxu0 0.0
    %2150 = vmatprep.subr.mxu0 0.0
    %2151 = vmatpush1.msra.mxu0 0.0
    %2152 = vmatprep.subr.mxu0 0.0
    %2153 = vmatpush1.msra.mxu0 0.0
    %2154 = vmatprep.subr.mxu0 0.0
    %2155 = vmatpush1.msra.mxu0 0.0
    %2156 = vmatprep.subr.mxu0 0.0
    %2157 = vmatpush1.msra.mxu0 0.0
    %2158 = vmatprep.subr.mxu0 0.0
    %2159 = vmatpush1.msra.mxu0 0.0
    %2160 = vmatprep.subr.mxu0 0.0
    %2161 = vmatpush1.msra.mxu0 0.0
    %2162 = vmatprep.subr.mxu0 0.0
    %2163 = vmatpush1.msra.mxu0 0.0
    %2164 = vmatprep.subr.mxu0 0.0
    %2165 = vmatpush1.msra.mxu0 0.0
    %2166 = vmatprep.subr.mxu0 0.0
    %2167 = vmatpush1.msra.mxu0 0.0
    %2168 = vmatprep.subr.mxu0 0.0
    %2169 = vmatpush1.msra.mxu0 0.0
    %2170 = vmatprep.subr.mxu0 0.0
    %2171 = vmatpush1.msra.mxu0 0.0
    %2172 = vmatprep.subr.mxu0 0.0
    %2173 = vmatpush1.msra.mxu0 0.0
    %2174 = vmatprep.subr.mxu0 0.0
    %2175 = vmatpush1.msra.mxu0 0.0
    %2176 = vmatprep.subr.mxu0 0.0
    %2177 = vmatpush1.msra.mxu0 0.0
    %2178 = vmatprep.mubr.f32.mxu0 0.0
    %2179 = vmatmul.mubr.f32.gmra.mrb[0].mxu0 %v2109
    %v2180 = vpop.f32.mrb[0].mxu0
    %v2181 = vadd.f32 0.0, %v2180
    %v2182 = vpop.f32.mrb[0].mxu0
    %2183 = vmatprep.mubr.f32.mxu0 0.0
    %2184 = vmatmul.mubr.f32.gmra.mrb[0].mxu0 %v2112
    %v2185 = vpop.f32.mrb[0].mxu0
    %v2186 = vadd.f32 0.0, %v2185
    %v2187 = vpop.f32.mrb[0].mxu0
    %2188 = vdwg.mxu0
    %v2189 = vsel %vm335, %v1914, 0.0
    %v2190 = vsel %vm335, %v2003, 0.0
    %v2191 = vadd.f32 %v2189, %v2190
    %v2192 = vsel %vm335, %v2092, 0.0
    %v2193 = vadd.f32 %v2191, %v2192
    %v2194 = vsel %vm335, %v2181, 0.0
    %v2195 = vadd.f32 %v2193, %v2194
    %v2196 = vsel %vm335, %v1919, 0.0
    %v2197 = vsel %vm335, %v2008, 0.0
    %v2198 = vadd.f32 %v2196, %v2197
    %v2199 = vsel %vm335, %v2097, 0.0
    %v2200 = vadd.f32 %v2198, %v2199
    %v2201 = vsel %vm335, %v2186, 0.0
    %v2202 = vadd.f32 %v2200, %v2201
    %v2204 = vsel %vm335, %v2195, 0
    %v2207 = vsel %vm335, %v2202, 0
    %2209 = vmatprep.subr.mxu0 0.0
    %2210 = vmatpush1.msra.mxu0 %v39
    %2211 = vmatprep.subr.mxu0 0.0
    %2212 = vmatpush1.msra.mxu0 %v40
    %2213 = vmatprep.subr.mxu0 0.0
    %2214 = vmatpush1.msra.mxu0 %v41
    %2215 = vmatprep.subr.mxu0 0.0
    %2216 = vmatpush1.msra.mxu0 %v42
    %2217 = vmatprep.subr.mxu0 0.0
    %2218 = vmatpush1.msra.mxu0 0.0
    %2219 = vmatprep.subr.mxu0 0.0
    %2220 = vmatpush1.msra.mxu0 0.0
    %2221 = vmatprep.subr.mxu0 0.0
    %2222 = vmatpush1.msra.mxu0 0.0
    %2223 = vmatprep.subr.mxu0 0.0
    %2224 = vmatpush1.msra.mxu0 0.0
    %2225 = vmatprep.subr.mxu0 0.0
    %2226 = vmatpush1.msra.mxu0 0.0
    %2227 = vmatprep.subr.mxu0 0.0
    %2228 = vmatpush1.msra.mxu0 0.0
    %2229 = vmatprep.subr.mxu0 0.0
    %2230 = vmatpush1.msra.mxu0 0.0
    %2231 = vmatprep.subr.mxu0 0.0
    %2232 = vmatpush1.msra.mxu0 0.0
    %2233 = vmatprep.subr.mxu0 0.0
    %2234 = vmatpush1.msra.mxu0 0.0
    %2235 = vmatprep.subr.mxu0 0.0
    %2236 = vmatpush1.msra.mxu0 0.0
    %2237 = vmatprep.subr.mxu0 0.0
    %2238 = vmatpush1.msra.mxu0 0.0
    %2239 = vmatprep.subr.mxu0 0.0
    %2240 = vmatpush1.msra.mxu0 0.0
    %2241 = vmatprep.subr.mxu0 0.0
    %2242 = vmatpush1.msra.mxu0 0.0
    %2243 = vmatprep.subr.mxu0 0.0
    %2244 = vmatpush1.msra.mxu0 0.0
    %2245 = vmatprep.subr.mxu0 0.0
    %2246 = vmatpush1.msra.mxu0 0.0
    %2247 = vmatprep.subr.mxu0 0.0
    %2248 = vmatpush1.msra.mxu0 0.0
    %2249 = vmatprep.subr.mxu0 0.0
    %2250 = vmatpush1.msra.mxu0 0.0
    %2251 = vmatprep.subr.mxu0 0.0
    %2252 = vmatpush1.msra.mxu0 0.0
    %2253 = vmatprep.subr.mxu0 0.0
    %2254 = vmatpush1.msra.mxu0 0.0
    %2255 = vmatprep.subr.mxu0 0.0
    %2256 = vmatpush1.msra.mxu0 0.0
    %2257 = vmatprep.subr.mxu0 0.0
    %2258 = vmatpush1.msra.mxu0 0.0
    %2259 = vmatprep.subr.mxu0 0.0
    %2260 = vmatpush1.msra.mxu0 0.0
    %2261 = vmatprep.subr.mxu0 0.0
    %2262 = vmatpush1.msra.mxu0 0.0
    %2263 = vmatprep.subr.mxu0 0.0
    %2264 = vmatpush1.msra.mxu0 0.0
    %2265 = vmatprep.subr.mxu0 0.0
    %2266 = vmatpush1.msra.mxu0 0.0
    %2267 = vmatprep.subr.mxu0 0.0
    %2268 = vmatpush1.msra.mxu0 0.0
    %2269 = vmatprep.subr.mxu0 0.0
    %2270 = vmatpush1.msra.mxu0 0.0
    %2271 = vmatprep.subr.mxu0 0.0
    %2272 = vmatpush1.msra.mxu0 0.0
    %2273 = vmatprep.mubr.f32.mxu0 0.0
    %2274 = vmatmul.mubr.f32.gmra.mrb[0].mxu0 %v2204
    %v2275 = vpop.f32.mrb[0].mxu0
    %v2276 = vadd.f32 %v1121, %v2275
    %v2277 = vpop.f32.mrb[0].mxu0
    %2278 = vmatprep.mubr.f32.mxu0 0.0
    %2279 = vmatmul.mubr.f32.gmra.mrb[0].mxu0 %v2207
    %v2280 = vpop.f32.mrb[0].mxu0
    %v2281 = vadd.f32 %v1121, %v2280
    %v2282 = vpop.f32.mrb[0].mxu0
    %2283 = vdwg.mxu0
    %v2284 = vmax.f32 %v2276, 0.0
    %v2285 = vmax.f32 %v2281, 0.0
    %v2287 = vsel %vm335, %v2284, 0
    %v2290 = vsel %vm335, %v2285, 0
    %2292 = vmatprep.subr.mxu0 0.0
    %2293 = vmatpush1.msra.mxu0 %v43
    %2294 = vmatprep.subr.mxu0 0.0
    %2295 = vmatpush1.msra.mxu0 %v44
    %2296 = vmatprep.subr.mxu0 0.0
    %2297 = vmatpush1.msra.mxu0 %v45
    %2298 = vmatprep.subr.mxu0 0.0
    %2299 = vmatpush1.msra.mxu0 %v46
    %2300 = vmatprep.subr.mxu0 0.0
    %2301 = vmatpush1.msra.mxu0 0.0
    %2302 = vmatprep.subr.mxu0 0.0
    %2303 = vmatpush1.msra.mxu0 0.0
    %2304 = vmatprep.subr.mxu0 0.0
    %2305 = vmatpush1.msra.mxu0 0.0
    %2306 = vmatprep.subr.mxu0 0.0
    %2307 = vmatpush1.msra.mxu0 0.0
    %2308 = vmatprep.subr.mxu0 0.0
    %2309 = vmatpush1.msra.mxu0 0.0
    %2310 = vmatprep.subr.mxu0 0.0
    %2311 = vmatpush1.msra.mxu0 0.0
    %2312 = vmatprep.subr.mxu0 0.0
    %2313 = vmatpush1.msra.mxu0 0.0
    %2314 = vmatprep.subr.mxu0 0.0
    %2315 = vmatpush1.msra.mxu0 0.0
    %2316 = vmatprep.subr.mxu0 0.0
    %2317 = vmatpush1.msra.mxu0 0.0
    %2318 = vmatprep.subr.mxu0 0.0
    %2319 = vmatpush1.msra.mxu0 0.0
    %2320 = vmatprep.subr.mxu0 0.0
    %2321 = vmatpush1.msra.mxu0 0.0
    %2322 = vmatprep.subr.mxu0 0.0
    %2323 = vmatpush1.msra.mxu0 0.0
    %2324 = vmatprep.subr.mxu0 0.0
    %2325 = vmatpush1.msra.mxu0 0.0
    %2326 = vmatprep.subr.mxu0 0.0
    %2327 = vmatpush1.msra.mxu0 0.0
    %2328 = vmatprep.subr.mxu0 0.0
    %2329 = vmatpush1.msra.mxu0 0.0
    %2330 = vmatprep.subr.mxu0 0.0
    %2331 = vmatpush1.msra.mxu0 0.0
    %2332 = vmatprep.subr.mxu0 0.0
    %2333 = vmatpush1.msra.mxu0 0.0
    %2334 = vmatprep.subr.mxu0 0.0
    %2335 = vmatpush1.msra.mxu0 0.0
    %2336 = vmatprep.subr.mxu0 0.0
    %2337 = vmatpush1.msra.mxu0 0.0
    %2338 = vmatprep.subr.mxu0 0.0
    %2339 = vmatpush1.msra.mxu0 0.0
    %2340 = vmatprep.subr.mxu0 0.0
    %2341 = vmatpush1.msra.mxu0 0.0
    %2342 = vmatprep.subr.mxu0 0.0
    %2343 = vmatpush1.msra.mxu0 0.0
    %2344 = vmatprep.subr.mxu0 0.0
    %2345 = vmatpush1.msra.mxu0 0.0
    %2346 = vmatprep.subr.mxu0 0.0
    %2347 = vmatpush1.msra.mxu0 0.0
    %2348 = vmatprep.subr.mxu0 0.0
    %2349 = vmatpush1.msra.mxu0 0.0
    %2350 = vmatprep.subr.mxu0 0.0
    %2351 = vmatpush1.msra.mxu0 0.0
    %2352 = vmatprep.subr.mxu0 0.0
    %2353 = vmatpush1.msra.mxu0 0.0
    %2354 = vmatprep.subr.mxu0 0.0
    %2355 = vmatpush1.msra.mxu0 0.0
    %2356 = vmatprep.mubr.f32.mxu0 0.0
    %2357 = vmatmul.mubr.f32.gmra.mrb[0].mxu0 %v2287
    %v2358 = vpop.f32.mrb[0].mxu0
    %v2359 = vadd.f32 0.0, %v2358
    %v2360 = vpop.f32.mrb[0].mxu0
    %2361 = vmatprep.mubr.f32.mxu0 0.0
    %2362 = vmatmul.mubr.f32.gmra.mrb[0].mxu0 %v2290
    %v2363 = vpop.f32.mrb[0].mxu0
    %v2364 = vadd.f32 0.0, %v2363
    %v2365 = vpop.f32.mrb[0].mxu0
    %2366 = vdwg.mxu0
    %v2367 = vlaneseq
    %v2368 = vshrl.u32 %v2367, 7
    %v2369 = vsub.s32 0, %v2368
    %v2370 = vrot.slane %v50, %v2369
    %2371 = vmatprep.subr.mxu0 0.0
    %2372 = vmatpush1.msra.mxu0 %v2359
    %2373 = vmatprep.subr.mxu0 0.0
    %2374 = vmatpush1.msra.mxu0 %v2364
    %2375 = vmatprep.subr.mxu0 0.0
    %2376 = vmatpush1.msra.mxu0 0.0
    %2377 = vmatprep.subr.mxu0 0.0
    %2378 = vmatpush1.msra.mxu0 0.0
    %2379 = vmatprep.subr.mxu0 0.0
    %2380 = vmatpush1.msra.mxu0 0.0
    %2381 = vmatprep.subr.mxu0 0.0
    %2382 = vmatpush1.msra.mxu0 0.0
    %2383 = vmatprep.subr.mxu0 0.0
    %2384 = vmatpush1.msra.mxu0 0.0
    %2385 = vmatprep.subr.mxu0 0.0
    %2386 = vmatpush1.msra.mxu0 0.0
    %2387 = vmatprep.subr.mxu0 0.0
    %2388 = vmatpush1.msra.mxu0 0.0
    %2389 = vmatprep.subr.mxu0 0.0
    %2390 = vmatpush1.msra.mxu0 0.0
    %2391 = vmatprep.subr.mxu0 0.0
    %2392 = vmatpush1.msra.mxu0 0.0
    %2393 = vmatprep.subr.mxu0 0.0
    %2394 = vmatpush1.msra.mxu0 0.0
    %2395 = vmatprep.subr.mxu0 0.0
    %2396 = vmatpush1.msra.mxu0 0.0
    %2397 = vmatprep.subr.mxu0 0.0
    %2398 = vmatpush1.msra.mxu0 0.0
    %2399 = vmatprep.subr.mxu0 0.0
    %2400 = vmatpush1.msra.mxu0 0.0
    %2401 = vmatprep.subr.mxu0 0.0
    %2402 = vmatpush1.msra.mxu0 0.0
    %2403 = vmatprep.subr.mxu0 0.0
    %2404 = vmatpush1.msra.mxu0 0.0
    %2405 = vmatprep.subr.mxu0 0.0
    %2406 = vmatpush1.msra.mxu0 0.0
    %2407 = vmatprep.subr.mxu0 0.0
    %2408 = vmatpush1.msra.mxu0 0.0
    %2409 = vmatprep.subr.mxu0 0.0
    %2410 = vmatpush1.msra.mxu0 0.0
    %2411 = vmatprep.subr.mxu0 0.0
    %2412 = vmatpush1.msra.mxu0 0.0
    %2413 = vmatprep.subr.mxu0 0.0
    %2414 = vmatpush1.msra.mxu0 0.0
    %2415 = vmatprep.subr.mxu0 0.0
    %2416 = vmatpush1.msra.mxu0 0.0
    %2417 = vmatprep.subr.mxu0 0.0
    %2418 = vmatpush1.msra.mxu0 0.0
    %2419 = vmatprep.subr.mxu0 0.0
    %2420 = vmatpush1.msra.mxu0 0.0
    %2421 = vmatprep.subr.mxu0 0.0
    %2422 = vmatpush1.msra.mxu0 0.0
    %2423 = vmatprep.subr.mxu0 0.0
    %2424 = vmatpush1.msra.mxu0 0.0
    %2425 = vmatprep.subr.mxu0 0.0
    %2426 = vmatpush1.msra.mxu0 0.0
    %2427 = vmatprep.subr.mxu0 0.0
    %2428 = vmatpush1.msra.mxu0 0.0
    %2429 = vmatprep.subr.mxu0 0.0
    %2430 = vmatpush1.msra.mxu0 0.0
    %2431 = vmatprep.subr.mxu0 0.0
    %2432 = vmatpush1.msra.mxu0 0.0
    %2433 = vmatprep.subr.mxu0 0.0
    %2434 = vmatpush1.msra.mxu0 0.0
    %2435 = vmatprep.mubr.f32.mxu0 0.0
    %2436 = vmatmul.mubr.f32.gmra.mrb[0].mxu0 %v81
    %v2437 = vpop.f32.mrb[0].mxu0
    %v2438 = vadd.f32 %v2370, %v2437
    %v2439 = vpop.f32.mrb[0].mxu0
    %2440 = vmatprep.mubr.f32.mxu0 0.0
    %2441 = vmatmul.mubr.f32.gmra.mrb[0].mxu0 %v84
    %v2442 = vpop.f32.mrb[0].mxu0
    %v2443 = vadd.f32 %v2370, %v2442
    %v2444 = vpop.f32.mrb[0].mxu0
    %2445 = vdwg.mxu0
    %v2446 = vxor.u32 %v2438, 2147483648
    %v2447 = vxor.u32 %v2443, 2147483648
    %v2448 = vmul.f32 %v2446, 1.442695
    %v2449 = vpow.pop %v2448
    %v2450 = vmul.f32 %v2447, 1.442695
    %v2451 = vpow.pop %v2450
    %v2452 = vadd.f32 %v2449, 1.0
    %v2453 = vadd.f32 %v2451, 1.0
    %v2454 = vrcp.pop %v2452
    %v2455 = vmul.f32 1.0, %v2454
    %v2456 = vrcp.pop %v2453
    %v2457 = vmul.f32 1.0, %v2456
    %2458 = vst [vmem:[#allocation5] sm:$0xff] %v2455
    %2459 = vst [vmem:[#allocation5 + $0x8] sm:$0xff] %v2457
    // Predicated region
    $region22: #{tpu_custom_call.1} parent=1 // pred_check
      _
    $region23: #{tpu_custom_call.1} parent=1 // pred_check_branch
      %2461 = sbr.rel (0) target = $region25
    $region24: #{tpu_custom_call.1} parent=1 // pred_region
      %s2463 = ssub.s32 256, 256
      %2464 = vsyncadd [#allocation4], %s2463
      %s2465 = sshll.u32 [#allocation5], 4
      %s2466 = int_to_ptr.vmem [resolvable:$true] %s2465
      %2471 = dma.vmem_to_hbm [thread:$0]  %s2466, 256, %s4, [#allocation4], 128, 128, 8
    $region25: #{tpu_custom_call.1} parent=1 // pred_fallthru
      _
    // Predicated region
    $region26: #{tpu_custom_call.1} parent=1 // pred_check
      _
    $region27: #{tpu_custom_call.1} parent=1 // pred_check_branch
      %2473 = sbr.rel (0) target = $region29
    $region28: #{tpu_custom_call.1} parent=1 // pred_region
      %2474 = dma.done [#allocation4], 256
    $region29: #{tpu_custom_call.1} parent=1 // pred_fallthru
      _
    %2475 = vsyncpa [#allocation3], 1
    %2476 = vsyncpa [#allocation4], 1

</llo_original>
